<compile_context>
chip_gen: v5e
topology: v5e:2x2
jax: 0.10.0
libtpu: 0.0.40
codegen_flags: <defaults>
</compile_context>

<pallas_src>
import math
from functools import partial

import jax
import jax.numpy as jnp
from jax.experimental import pallas as pl
from jax.experimental.pallas import tpu as pltpu


# ---------------------------------------------------------------------------
# per-chip tuning: VMEM budget with headroom (review item: don't claim the
# whole physical VMEM on v7x; raise the limit on v5e/v6e for bigger tiles)
# ---------------------------------------------------------------------------
def _vmem_limit_bytes():
    mib = 1024 * 1024
    try:
        info = pltpu.get_tpu_info()
        cap = int(getattr(info, "vmem_capacity_bytes", 64 * mib))
    except Exception:
        cap = 64 * mib
    return int(max(32 * mib, min(cap, 128 * mib) - 16 * mib))


_VMEM_LIMIT = _vmem_limit_bytes()
_BIG_VMEM = _VMEM_LIMIT >= 96 * 1024 * 1024       # v5e / v6e class


# ---------------------------------------------------------------------------
# in-kernel helpers (traced inside the Pallas kernels; f32 math)
# ---------------------------------------------------------------------------
def _layernorm(x, w, b, eps=1e-5):
    mu = jnp.mean(x, axis=-1, keepdims=True)
    var = jnp.mean((x - mu) ** 2, axis=-1, keepdims=True)
    return (x - mu) * jax.lax.rsqrt(var + eps) * w + b


def _gelu_tanh(x):
    c = math.sqrt(2.0 / math.pi)
    return 0.5 * x * (1.0 + jnp.tanh(c * (x + 0.044715 * x * x * x)))


# ---------------------------------------------------------------------------
# transformer stack kernel
# ---------------------------------------------------------------------------
def gpt_blocks_kernel(x_ref,
                      ln1w, ln1b, wqkv, bqkv, wpr, bpr,
                      ln2w, ln2b, wfc, bfc, wp2, bp2,
                      lnfw, lnfb,
                      o_ref, xs, attn_sc,
                      *, n_head, mlp_chunk):
    """All transformer Blocks for one batch element.

    grid = (B, n_layer).  The residual stream is resident in the f32 VMEM
    scratch `xs` across the layer axis; ln_f is fused at the last layer and
    the result is written to o_ref in bf16.
    """
    l = pl.program_id(1)
    n_layers = pl.num_programs(1)

    @pl.when(l == 0)
    def _():
        xs[...] = x_ref[...].astype(jnp.float32)

    x = xs[...]                                    # (T, C) f32 residual stream
    T, C = x.shape
    hd = C // n_head
    scale = 1.0 / math.sqrt(hd)

    # ---- causal self-attention ----
    h = _layernorm(x, ln1w[...], ln1b[...])
    hb = h.astype(jnp.bfloat16)
    qkv = jnp.dot(hb, wqkv[...], preferred_element_type=jnp.float32) + bqkv[...]
    q, k, v = qkv[:, :C], qkv[:, C:2 * C], qkv[:, 2 * C:]

    row = jax.lax.broadcasted_iota(jnp.int32, (T, T), 0)
    col = jax.lax.broadcasted_iota(jnp.int32, (T, T), 1)
    causal = row >= col

    # Per-head attention; head outputs are written into a lane-dense (T, C)
    # bf16 VMEM slab so c_proj runs as ONE K=C matmul (full MXU fill) instead
    # of n_head K=hd matmuls.
    # TODO(synk): for long T, add flash-style query/KV tiling (online softmax)
    # so the per-head (T, T) f32 score matrix stays bounded in VMEM; the query
    # tile axis then also provides a second parallel axis for v7x megacore.
    for hh in range(n_head):
        lo = hh * hd
        qh = (q[:, lo:lo + hd] * scale).astype(jnp.bfloat16)   # scale folded in
        kh = k[:, lo:lo + hd].astype(jnp.bfloat16)
        vh = v[:, lo:lo + hd].astype(jnp.bfloat16)
        s = jax.lax.dot_general(qh, kh, (((1,), (1,)), ((), ())),
                                preferred_element_type=jnp.float32)   # (T, T)
        s = jnp.where(causal, s, -1e30)
        s = s - jnp.max(s, axis=-1, keepdims=True)
        p = jnp.exp(s)
        p = p * pl.reciprocal(jnp.sum(p, axis=-1, keepdims=True), approx=True)
        yh = jnp.dot(p.astype(jnp.bfloat16), vh,
                     preferred_element_type=jnp.float32)              # (T, hd)
        attn_sc[:, lo:lo + hd] = yh.astype(jnp.bfloat16)

    attn = jnp.dot(attn_sc[...], wpr[...],
                   preferred_element_type=jnp.float32)                # (T, C)
    x = x + attn + bpr[...]                        # residual 1 (+ c_proj bias)

    # ---- MLP (hidden dim processed in chunks to bound the (T,4C) buffer) ----
    # TODO(synk): for v7x at GPT-2 medium/large sizes, also tile the 4C axis of
    # w_fc/w_mlp_proj HBM streaming (inner emit_pipeline) so only a chunk of
    # the FC weights is double-buffered in VMEM.
    h = _layernorm(x, ln2w[...], ln2b[...])
    hb = h.astype(jnp.bfloat16)
    hidden = wfc.shape[-1]                         # 4C (static)
    mlp = jnp.zeros((T, C), jnp.float32)
    for cs in range(0, hidden, mlp_chunk):
        ce = cs + mlp_chunk
        hc = jnp.dot(hb, wfc[:, cs:ce],
                     preferred_element_type=jnp.float32) + bfc[:, cs:ce]
        hc = _gelu_tanh(hc)
        mlp = mlp + jnp.dot(hc.astype(jnp.bfloat16), wp2[cs:ce, :],
                            preferred_element_type=jnp.float32)
    x = x + mlp + bp2[...]                         # residual 2 (+ c_proj bias)

    xs[...] = x

    @pl.when(l == n_layers - 1)
    def _():
        o_ref[...] = _layernorm(x, lnfw[...], lnfb[...]).astype(o_ref.dtype)


# ---------------------------------------------------------------------------
# fused tied lm_head + cross-entropy statistics
# ---------------------------------------------------------------------------
def lm_head_loss_kernel(x_ref, wte_ref, tgt_ref, logits_ref, nll_ref,
                        m_sc, l_sc, t_sc, *, tile_v, vocab):
    """grid = (B, V//tile_v), vocab axis 'arbitrary'.

    Emits bf16 logits (single HBM writeback) while maintaining an online
    logsumexp and the target logit in VMEM scratch across vocab tiles; the
    per-token NLL is written on the last vocab tile, so XLA never re-reads
    the (B, T, V) logits for log_softmax.
    """
    v = pl.program_id(1)
    nv = pl.num_programs(1)

    @pl.when(v == 0)
    def _():
        m_sc[...] = jnp.full_like(m_sc, -jnp.inf)
        l_sc[...] = jnp.zeros_like(l_sc)
        t_sc[...] = jnp.zeros_like(t_sc)

    # logits tile: ln_f(x) (bf16) @ wte_tile.T  (contract on C; no HBM transpose)
    s = jax.lax.dot_general(x_ref[...], wte_ref[...], (((1,), (1,)), ((), ())),
                            preferred_element_type=jnp.float32)       # (T, tv)
    logits_ref[...] = s.astype(logits_ref.dtype)

    col = v * tile_v + jax.lax.broadcasted_iota(jnp.int32, s.shape, 1)
    valid = col < vocab                          # mask remainder-tile padding
    sm = jnp.where(valid, s, -jnp.inf)

    # online logsumexp across vocab tiles
    m_new = jnp.maximum(m_sc[...], jnp.max(sm, axis=-1, keepdims=True))
    l_sc[...] = (l_sc[...] * jnp.exp(m_sc[...] - m_new)
                 + jnp.sum(jnp.exp(sm - m_new), axis=-1, keepdims=True))
    m_sc[...] = m_new

    # target logit (exactly one vocab tile contains it per token)
    tgt = tgt_ref[...]                                                 # (T, 1)
    t_sc[...] = t_sc[...] + jnp.sum(jnp.where(col == tgt, s, 0.0),
                                    axis=-1, keepdims=True)

    @pl.when(v == nv - 1)
    def _():
        lse = m_sc[...] + jnp.log(l_sc[...])
        nll_ref[...] = lse - t_sc[...]


# ---------------------------------------------------------------------------
# wrappers around pallas_call
# ---------------------------------------------------------------------------
def apply_blocks(x, p, n_head):
    B, T, C = x.shape
    L = p["w_qkv"].shape[0]

    def layer_spec(arr):
        nd = arr.ndim
        return pl.BlockSpec((None,) + arr.shape[1:],
                            lambda b, l, _nd=nd: (l,) + (0,) * (_nd - 1))

    def shared_spec(arr):
        nd = arr.ndim
        return pl.BlockSpec(arr.shape, lambda b, l, _nd=nd: (0,) * _nd)

    layer_arrays = [p["ln1_w"], p["ln1_b"], p["w_qkv"], p["b_qkv"],
                    p["w_attn_proj"], p["b_attn_proj"],
                    p["ln2_w"], p["ln2_b"], p["w_fc"], p["b_fc"],
                    p["w_mlp_proj"], p["b_mlp_proj"]]

    in_specs = [pl.BlockSpec((None, T, C), lambda b, l: (b, 0, 0))]
    in_specs += [layer_spec(a) for a in layer_arrays]
    in_specs += [shared_spec(p["lnf_w"]), shared_spec(p["lnf_b"])]

    # bigger MLP chunks on 128 MiB-VMEM chips; 512 on v7x (64 MiB)
    hidden = 4 * C
    mlp_chunk = min(hidden, 2048 if _BIG_VMEM else 512)
    if hidden % mlp_chunk:            # avoid non-lane-dense remainder chunks
        mlp_chunk = hidden

    # TODO(synk): when B is large and T small, fold several batch rows into one
    # block to amortize the per-layer weight DMA across more tokens.
    return pl.pallas_call(
        partial(gpt_blocks_kernel, n_head=n_head, mlp_chunk=mlp_chunk),
        out_shape=jax.ShapeDtypeStruct((B, T, C), jnp.bfloat16),
        grid_spec=pltpu.PrefetchScalarGridSpec(
            num_scalar_prefetch=0,
            grid=(B, L),
            in_specs=in_specs,
            out_specs=pl.BlockSpec((None, T, C), lambda b, l: (b, 0, 0)),
            scratch_shapes=[pltpu.VMEM((T, C), jnp.float32),      # residual
                            pltpu.VMEM((T, C), jnp.bfloat16)]),   # head-out slab
        compiler_params=pltpu.CompilerParams(
            dimension_semantics=("parallel", "arbitrary"),
            vmem_limit_bytes=_VMEM_LIMIT),
    )(x, *layer_arrays, p["lnf_w"], p["lnf_b"])


def apply_lm_head(x_ln, wte_bf16, targets):
    B, T, C = x_ln.shape
    V = wte_bf16.shape[0]
    tv = min(2048 if _BIG_VMEM else 1024, V)
    nvt = pl.cdiv(V, tv)
    tgt = targets.reshape(B, T, 1).astype(jnp.int32)

    logits, nll = pl.pallas_call(
        partial(lm_head_loss_kernel, tile_v=tv, vocab=V),
        out_shape=(jax.ShapeDtypeStruct((B, T, V), jnp.bfloat16),
                   jax.ShapeDtypeStruct((B, T, 1), jnp.float32)),
        grid_spec=pltpu.PrefetchScalarGridSpec(
            num_scalar_prefetch=0,
            grid=(B, nvt),
            in_specs=[pl.BlockSpec((None, T, C), lambda b, v: (b, 0, 0)),
                      pl.BlockSpec((tv, C), lambda b, v: (v, 0)),
                      pl.BlockSpec((None, T, 1), lambda b, v: (b, 0, 0))],
            out_specs=[pl.BlockSpec((None, T, tv), lambda b, v: (b, 0, v)),
                       pl.BlockSpec((None, T, 1), lambda b, v: (b, 0, 0))],
            scratch_shapes=[pltpu.VMEM((T, 1), jnp.float32),   # running max
                            pltpu.VMEM((T, 1), jnp.float32),   # running sumexp
                            pltpu.VMEM((T, 1), jnp.float32)]), # target logit
        compiler_params=pltpu.CompilerParams(
            dimension_semantics=("parallel", "arbitrary"),
            vmem_limit_bytes=_VMEM_LIMIT),
    )(x_ln, wte_bf16, tgt)
    return logits, nll[..., 0]


# ---------------------------------------------------------------------------
# parameter construction (mirrors GPT.__init__ shapes; Linear (out,in)->(in,out))
# ---------------------------------------------------------------------------
def init_params(key, *, vocab_size, block_size, n_layer, n_head, n_embd):
    C, L = n_embd, n_layer
    std = 0.02
    ks = jax.random.split(key, 2 + 4 * L)

    wte = std * jax.random.normal(ks[0], (vocab_size, C), jnp.float32)
    wpe = std * jax.random.normal(ks[1], (block_size, C), jnp.float32)

    def lin(k, in_dim, out_dim):
        # PyTorch stores (out, in); we build the already-transposed (in, out),
        # kept in bf16 for the MXU.
        return (std * jax.random.normal(k, (in_dim, out_dim), jnp.float32)
                ).astype(jnp.bfloat16)

    params = {
        "wte": wte,                                    # f32, used for the gather
        "wte_bf16": wte.astype(jnp.bfloat16),          # tied lm_head weight (V, C)
        "wpe": wpe,
        "ln1_w": jnp.ones((L, 1, C), jnp.float32),
        "ln1_b": jnp.zeros((L, 1, C), jnp.float32),
        "w_qkv": jnp.stack([lin(ks[2 + 4 * l + 0], C, 3 * C) for l in range(L)]),
        "b_qkv": jnp.zeros((L, 1, 3 * C), jnp.float32),
        "w_attn_proj": jnp.stack([lin(ks[2 + 4 * l + 1], C, C) for l in range(L)]),
        "b_attn_proj": jnp.zeros((L, 1, C), jnp.float32),
        "ln2_w": jnp.ones((L, 1, C), jnp.float32),
        "ln2_b": jnp.zeros((L, 1, C), jnp.float32),
        "w_fc": jnp.stack([lin(ks[2 + 4 * l + 2], C, 4 * C) for l in range(L)]),
        "b_fc": jnp.zeros((L, 1, 4 * C), jnp.float32),
        "w_mlp_proj": jnp.stack([lin(ks[2 + 4 * l + 3], 4 * C, C) for l in range(L)]),
        "b_mlp_proj": jnp.zeros((L, 1, C), jnp.float32),
        "lnf_w": jnp.ones((1, C), jnp.float32),
        "lnf_b": jnp.zeros((1, C), jnp.float32),
    }
    return params


def gpt_forward(params, idx, n_head, targets=None):
    B, T = idx.shape
    # embedding gathers: plain-JAX glue
    tok_emb = jnp.take(params["wte"], idx, axis=0)         # (B, T, C) f32
    pos_emb = params["wpe"][:T]                             # (T, C)
    # kernel residual scratch is f32; feed the input in bf16 (halves input DMA)
    x = (tok_emb + pos_emb[None, :, :]).astype(jnp.bfloat16)

    # all layers + ln_f in one weight-streaming pallas_call
    x_ln = apply_blocks(x, params, n_head)                  # (B, T, C) bf16

    # fused vocab-tiled tied lm_head + cross-entropy statistics
    tgt = targets if targets is not None else jnp.zeros((B, T), jnp.int32)
    logits, nll = apply_lm_head(x_ln, params["wte_bf16"], tgt)

    loss = jnp.mean(nll) if targets is not None else None
    return logits, loss


# ---------------------------------------------------------------------------
if __name__ == "__main__":
    # small config consistent with the module
    vocab_size, block_size, n_layer, n_head, n_embd = 128, 16, 2, 4, 32
    B, T = 2, 8

    key = jax.random.PRNGKey(0)
    pkey, ikey, tkey = jax.random.split(key, 3)
    params = init_params(pkey, vocab_size=vocab_size, block_size=block_size,
                         n_layer=n_layer, n_head=n_head, n_embd=n_embd)

    idx = jax.random.randint(ikey, (B, T), 0, vocab_size, dtype=jnp.int32)
    targets = jax.random.randint(tkey, (B, T), 0, vocab_size, dtype=jnp.int32)

    logits, loss = gpt_forward(params, idx, n_head, targets=targets)
    jax.block_until_ready(logits)
    jax.block_until_ready(loss)

    assert logits.shape == (B, T, vocab_size)
    assert jnp.isfinite(loss)
    print("KERNEL_OK")
</pallas_src>

<mosaic_0001>
module attributes {stable_mosaic.version = 11 : i64} {
  func.func @gpt_blocks_kernel(%arg0: i32, %arg1: i32, %arg2: memref<1x8x32xbf16, #tpu.memory_space<vmem>>, %arg3: memref<1x1x32xf32, #tpu.memory_space<vmem>>, %arg4: memref<1x1x32xf32, #tpu.memory_space<vmem>>, %arg5: memref<1x32x96xbf16, #tpu.memory_space<vmem>>, %arg6: memref<1x1x96xf32, #tpu.memory_space<vmem>>, %arg7: memref<1x32x32xbf16, #tpu.memory_space<vmem>>, %arg8: memref<1x1x32xf32, #tpu.memory_space<vmem>>, %arg9: memref<1x1x32xf32, #tpu.memory_space<vmem>>, %arg10: memref<1x1x32xf32, #tpu.memory_space<vmem>>, %arg11: memref<1x32x128xbf16, #tpu.memory_space<vmem>>, %arg12: memref<1x1x128xf32, #tpu.memory_space<vmem>>, %arg13: memref<1x128x32xbf16, #tpu.memory_space<vmem>>, %arg14: memref<1x1x32xf32, #tpu.memory_space<vmem>>, %arg15: memref<1x32xf32, #tpu.memory_space<vmem>>, %arg16: memref<1x32xf32, #tpu.memory_space<vmem>>, %arg17: memref<1x8x32xbf16, #tpu.memory_space<vmem>>, %arg18: memref<8x32xf32, #tpu.memory_space<vmem>>, %arg19: memref<8x32xbf16, #tpu.memory_space<vmem>>) attributes {dimension_semantics = [#tpu.dimension_semantics<parallel>, #tpu.dimension_semantics<arbitrary>], iteration_bounds = array<i64: 2, 2>, scalar_prefetch = 0 : i64, scratch_operands = 2 : i64, tpu.core_type = #tpu.core_type<tc>, window_params = [{transform_indices = @transform_0, window_bounds = array<i64: 1, 8, 32>}, {transform_indices = @transform_1, window_bounds = array<i64: 1, 1, 32>}, {transform_indices = @transform_2, window_bounds = array<i64: 1, 1, 32>}, {transform_indices = @transform_3, window_bounds = array<i64: 1, 32, 96>}, {transform_indices = @transform_4, window_bounds = array<i64: 1, 1, 96>}, {transform_indices = @transform_5, window_bounds = array<i64: 1, 32, 32>}, {transform_indices = @transform_6, window_bounds = array<i64: 1, 1, 32>}, {transform_indices = @transform_7, window_bounds = array<i64: 1, 1, 32>}, {transform_indices = @transform_8, window_bounds = array<i64: 1, 1, 32>}, {transform_indices = @transform_9, window_bounds = array<i64: 1, 32, 128>}, {transform_indices = @transform_10, window_bounds = array<i64: 1, 1, 128>}, {transform_indices = @transform_11, window_bounds = array<i64: 1, 128, 32>}, {transform_indices = @transform_12, window_bounds = array<i64: 1, 1, 32>}, {pipeline_mode = #tpu.pipeline_mode<synchronous>, transform_indices = @transform_13, window_bounds = array<i64: 1, 32>}, {pipeline_mode = #tpu.pipeline_mode<synchronous>, transform_indices = @transform_14, window_bounds = array<i64: 1, 32>}, {transform_indices = @transform_15, window_bounds = array<i64: 1, 8, 32>}]} {
    %c0_i32 = arith.constant 0 : i32
    %0 = arith.cmpi eq, %arg1, %c0_i32 : i32
    %1 = arith.extui %0 : i1 to i32
    %c0_i32_0 = arith.constant 0 : i32
    %2 = arith.cmpi ne, %1, %c0_i32_0 : i32
    scf.if %2 {
      %c0_90 = arith.constant 0 : index
      %c0_91 = arith.constant 0 : index
      %c0_92 = arith.constant 0 : index
      %215 = vector.load %arg2[%c0_90, %c0_91, %c0_92] : memref<1x8x32xbf16, #tpu.memory_space<vmem>>, vector<1x8x32xbf16>
      %216 = vector.shape_cast %215 : vector<1x8x32xbf16> to vector<8x32xbf16>
      %217 = arith.extf %216 : vector<8x32xbf16> to vector<8x32xf32>
      %c0_93 = arith.constant 0 : index
      %c0_94 = arith.constant 0 : index
      %218 = vector.load %arg18[%c0_93, %c0_94] : memref<8x32xf32, #tpu.memory_space<vmem>>, vector<8x32xf32>
      tpu.vector_store %arg18[%c0_93, %c0_94], %217 {strides = array<i32>} : memref<8x32xf32, #tpu.memory_space<vmem>>, vector<8x32xf32>,
    } else {
    }
    %c0 = arith.constant 0 : index
    %c0_1 = arith.constant 0 : index
    %3 = vector.load %arg18[%c0, %c0_1] : memref<8x32xf32, #tpu.memory_space<vmem>>, vector<8x32xf32>
    %c0_2 = arith.constant 0 : index
    %c0_3 = arith.constant 0 : index
    %c0_4 = arith.constant 0 : index
    %4 = vector.load %arg3[%c0_2, %c0_3, %c0_4] : memref<1x1x32xf32, #tpu.memory_space<vmem>>, vector<1x1x32xf32>
    %5 = vector.shape_cast %4 : vector<1x1x32xf32> to vector<1x32xf32>
    %c0_5 = arith.constant 0 : index
    %c0_6 = arith.constant 0 : index
    %c0_7 = arith.constant 0 : index
    %6 = vector.load %arg4[%c0_5, %c0_6, %c0_7] : memref<1x1x32xf32, #tpu.memory_space<vmem>>, vector<1x1x32xf32>
    %7 = vector.shape_cast %6 : vector<1x1x32xf32> to vector<1x32xf32>
    %cst = arith.constant dense<0.000000e+00> : vector<8xf32>
    %8 = vector.multi_reduction <add>, %3, %cst [1] : vector<8x32xf32> to vector<8xf32>
    %9 = vector.shape_cast %8 : vector<8xf32> to vector<8x1xf32>
    %cst_8 = arith.constant 3.200000e+01 : f32
    %10 = vector.broadcast %cst_8 : f32 to vector<8x1xf32>
    %11 = arith.divf %9, %10 : vector<8x1xf32>
    %12 = vector.broadcast %11 : vector<8x1xf32> to vector<8x32xf32>
    %13 = arith.subf %3, %12 : vector<8x32xf32>
    %14 = arith.mulf %13, %13 : vector<8x32xf32>
    %cst_9 = arith.constant dense<0.000000e+00> : vector<8xf32>
    %15 = vector.multi_reduction <add>, %14, %cst_9 [1] : vector<8x32xf32> to vector<8xf32>
    %16 = vector.shape_cast %15 : vector<8xf32> to vector<8x1xf32>
    %cst_10 = arith.constant 3.200000e+01 : f32
    %17 = vector.broadcast %cst_10 : f32 to vector<8x1xf32>
    %18 = arith.divf %16, %17 : vector<8x1xf32>
    %19 = vector.broadcast %11 : vector<8x1xf32> to vector<8x32xf32>
    %20 = arith.subf %3, %19 : vector<8x32xf32>
    %cst_11 = arith.constant 9.99999974E-6 : f32
    %21 = vector.broadcast %cst_11 : f32 to vector<8x1xf32>
    %22 = arith.addf %18, %21 : vector<8x1xf32>
    %23 = math.rsqrt %22 : vector<8x1xf32>
    %24 = vector.broadcast %23 : vector<8x1xf32> to vector<8x32xf32>
    %25 = arith.mulf %20, %24 : vector<8x32xf32>
    %26 = vector.broadcast %5 : vector<1x32xf32> to vector<8x32xf32>
    %27 = arith.mulf %25, %26 : vector<8x32xf32>
    %28 = vector.broadcast %7 : vector<1x32xf32> to vector<8x32xf32>
    %29 = arith.addf %27, %28 : vector<8x32xf32>
    %30 = arith.truncf %29 : vector<8x32xf32> to vector<8x32xbf16>
    %c0_12 = arith.constant 0 : index
    %c0_13 = arith.constant 0 : index
    %c0_14 = arith.constant 0 : index
    %31 = vector.load %arg5[%c0_12, %c0_13, %c0_14] : memref<1x32x96xbf16, #tpu.memory_space<vmem>>, vector<1x32x96xbf16>
    %32 = vector.shape_cast %31 : vector<1x32x96xbf16> to vector<32x96xbf16>
    %cst_15 = arith.constant dense<0.000000e+00> : vector<8x96xf32>
    %33 = tpu.matmul %30, %32, %cst_15 {dimension_numbers = #tpu.dot_dimension_numbers<[1], [0], [0], [1], [0, 0, 1, 1], [], []>} : vector<8x32xbf16>, vector<32x96xbf16>, vector<8x96xf32> -> vector<8x96xf32>
    %c0_16 = arith.constant 0 : index
    %c0_17 = arith.constant 0 : index
    %c0_18 = arith.constant 0 : index
    %34 = vector.load %arg6[%c0_16, %c0_17, %c0_18] : memref<1x1x96xf32, #tpu.memory_space<vmem>>, vector<1x1x96xf32>
    %35 = vector.shape_cast %34 : vector<1x1x96xf32> to vector<1x96xf32>
    %36 = vector.broadcast %35 : vector<1x96xf32> to vector<8x96xf32>
    %37 = arith.addf %33, %36 : vector<8x96xf32>
    %38 = vector.extract_strided_slice %37 {offsets = [0, 0], sizes = [8, 32], strides = [1, 1]} : vector<8x96xf32> to vector<8x32xf32>
    %39 = vector.extract_strided_slice %37 {offsets = [0, 32], sizes = [8, 32], strides = [1, 1]} : vector<8x96xf32> to vector<8x32xf32>
    %40 = vector.extract_strided_slice %37 {offsets = [0, 64], sizes = [8, 32], strides = [1, 1]} : vector<8x96xf32> to vector<8x32xf32>
    %41 = tpu.iota {dimensions = array<i32: 0>} : vector<8x8xi32>
    %42 = tpu.iota {dimensions = array<i32: 1>} : vector<8x8xi32>
    %43 = arith.cmpi sge, %41, %42 : vector<8x8xi32>
    %44 = vector.extract_strided_slice %38 {offsets = [0, 0], sizes = [8, 8], strides = [1, 1]} : vector<8x32xf32> to vector<8x8xf32>
    %cst_19 = arith.constant 0.353553385 : f32
    %45 = vector.broadcast %cst_19 : f32 to vector<8x8xf32>
    %46 = arith.mulf %44, %45 : vector<8x8xf32>
    %47 = arith.truncf %46 : vector<8x8xf32> to vector<8x8xbf16>
    %48 = vector.extract_strided_slice %39 {offsets = [0, 0], sizes = [8, 8], strides = [1, 1]} : vector<8x32xf32> to vector<8x8xf32>
    %49 = arith.truncf %48 : vector<8x8xf32> to vector<8x8xbf16>
    %50 = vector.extract_strided_slice %40 {offsets = [0, 0], sizes = [8, 8], strides = [1, 1]} : vector<8x32xf32> to vector<8x8xf32>
    %51 = arith.truncf %50 : vector<8x8xf32> to vector<8x8xbf16>
    %cst_20 = arith.constant dense<0.000000e+00> : vector<8x8xf32>
    %52 = tpu.matmul %47, %49, %cst_20 {dimension_numbers = #tpu.dot_dimension_numbers<[1], [1], [0], [0], [0, 0, 1, 0], [], []>} : vector<8x8xbf16>, vector<8x8xbf16>, vector<8x8xf32> -> vector<8x8xf32>
    %cst_21 = arith.constant -1.000000e+30 : f32
    %53 = vector.broadcast %cst_21 : f32 to vector<8x8xf32>
    %54 = arith.select %43, %52, %53 : vector<8x8xi1>, vector<8x8xf32>
    %cst_22 = arith.constant dense<0xFF800000> : vector<8xf32>
    %55 = vector.multi_reduction <maximumf>, %54, %cst_22 [1] : vector<8x8xf32> to vector<8xf32>
    %56 = vector.shape_cast %55 : vector<8xf32> to vector<8x1xf32>
    %57 = vector.broadcast %56 : vector<8x1xf32> to vector<8x8xf32>
    %58 = arith.subf %54, %57 : vector<8x8xf32>
    %59 = math.exp %58 : vector<8x8xf32>
    %cst_23 = arith.constant dense<0.000000e+00> : vector<8xf32>
    %60 = vector.multi_reduction <add>, %59, %cst_23 [1] : vector<8x8xf32> to vector<8xf32>
    %61 = vector.shape_cast %60 : vector<8xf32> to vector<8x1xf32>
    %62 = tpu.reciprocal %61 {approx = true} : vector<8x1xf32> -> vector<8x1xf32>
    %63 = vector.broadcast %62 : vector<8x1xf32> to vector<8x8xf32>
    %64 = arith.mulf %59, %63 : vector<8x8xf32>
    %65 = arith.truncf %64 : vector<8x8xf32> to vector<8x8xbf16>
    %cst_24 = arith.constant dense<0.000000e+00> : vector<8x8xf32>
    %66 = tpu.matmul %65, %51, %cst_24 {dimension_numbers = #tpu.dot_dimension_numbers<[1], [0], [0], [1], [0, 0, 1, 1], [], []>} : vector<8x8xbf16>, vector<8x8xbf16>, vector<8x8xf32> -> vector<8x8xf32>
    %67 = arith.truncf %66 : vector<8x8xf32> to vector<8x8xbf16>
    %c0_25 = arith.constant 0 : index
    %c0_26 = arith.constant 0 : index
    %68 = vector.load %arg19[%c0_25, %c0_26] : memref<8x32xbf16, #tpu.memory_space<vmem>>, vector<8x8xbf16>
    tpu.vector_store %arg19[%c0_25, %c0_26], %67 {strides = array<i32>} : memref<8x32xbf16, #tpu.memory_space<vmem>>, vector<8x8xbf16>,
    %69 = vector.extract_strided_slice %38 {offsets = [0, 8], sizes = [8, 8], strides = [1, 1]} : vector<8x32xf32> to vector<8x8xf32>
    %cst_27 = arith.constant 0.353553385 : f32
    %70 = vector.broadcast %cst_27 : f32 to vector<8x8xf32>
    %71 = arith.mulf %69, %70 : vector<8x8xf32>
    %72 = arith.truncf %71 : vector<8x8xf32> to vector<8x8xbf16>
    %73 = vector.extract_strided_slice %39 {offsets = [0, 8], sizes = [8, 8], strides = [1, 1]} : vector<8x32xf32> to vector<8x8xf32>
    %74 = arith.truncf %73 : vector<8x8xf32> to vector<8x8xbf16>
    %75 = vector.extract_strided_slice %40 {offsets = [0, 8], sizes = [8, 8], strides = [1, 1]} : vector<8x32xf32> to vector<8x8xf32>
    %76 = arith.truncf %75 : vector<8x8xf32> to vector<8x8xbf16>
    %cst_28 = arith.constant dense<0.000000e+00> : vector<8x8xf32>
    %77 = tpu.matmul %72, %74, %cst_28 {dimension_numbers = #tpu.dot_dimension_numbers<[1], [1], [0], [0], [0, 0, 1, 0], [], []>} : vector<8x8xbf16>, vector<8x8xbf16>, vector<8x8xf32> -> vector<8x8xf32>
    %cst_29 = arith.constant -1.000000e+30 : f32
    %78 = vector.broadcast %cst_29 : f32 to vector<8x8xf32>
    %79 = arith.select %43, %77, %78 : vector<8x8xi1>, vector<8x8xf32>
    %cst_30 = arith.constant dense<0xFF800000> : vector<8xf32>
    %80 = vector.multi_reduction <maximumf>, %79, %cst_30 [1] : vector<8x8xf32> to vector<8xf32>
    %81 = vector.shape_cast %80 : vector<8xf32> to vector<8x1xf32>
    %82 = vector.broadcast %81 : vector<8x1xf32> to vector<8x8xf32>
    %83 = arith.subf %79, %82 : vector<8x8xf32>
    %84 = math.exp %83 : vector<8x8xf32>
    %cst_31 = arith.constant dense<0.000000e+00> : vector<8xf32>
    %85 = vector.multi_reduction <add>, %84, %cst_31 [1] : vector<8x8xf32> to vector<8xf32>
    %86 = vector.shape_cast %85 : vector<8xf32> to vector<8x1xf32>
    %87 = tpu.reciprocal %86 {approx = true} : vector<8x1xf32> -> vector<8x1xf32>
    %88 = vector.broadcast %87 : vector<8x1xf32> to vector<8x8xf32>
    %89 = arith.mulf %84, %88 : vector<8x8xf32>
    %90 = arith.truncf %89 : vector<8x8xf32> to vector<8x8xbf16>
    %cst_32 = arith.constant dense<0.000000e+00> : vector<8x8xf32>
    %91 = tpu.matmul %90, %76, %cst_32 {dimension_numbers = #tpu.dot_dimension_numbers<[1], [0], [0], [1], [0, 0, 1, 1], [], []>} : vector<8x8xbf16>, vector<8x8xbf16>, vector<8x8xf32> -> vector<8x8xf32>
    %92 = arith.truncf %91 : vector<8x8xf32> to vector<8x8xbf16>
    %c0_33 = arith.constant 0 : index
    %c8 = arith.constant 8 : index
    %93 = vector.load %arg19[%c0_33, %c8] : memref<8x32xbf16, #tpu.memory_space<vmem>>, vector<8x8xbf16>
    tpu.vector_store %arg19[%c0_33, %c8], %92 {strides = array<i32>} : memref<8x32xbf16, #tpu.memory_space<vmem>>, vector<8x8xbf16>,
    %94 = vector.extract_strided_slice %38 {offsets = [0, 16], sizes = [8, 8], strides = [1, 1]} : vector<8x32xf32> to vector<8x8xf32>
    %cst_34 = arith.constant 0.353553385 : f32
    %95 = vector.broadcast %cst_34 : f32 to vector<8x8xf32>
    %96 = arith.mulf %94, %95 : vector<8x8xf32>
    %97 = arith.truncf %96 : vector<8x8xf32> to vector<8x8xbf16>
    %98 = vector.extract_strided_slice %39 {offsets = [0, 16], sizes = [8, 8], strides = [1, 1]} : vector<8x32xf32> to vector<8x8xf32>
    %99 = arith.truncf %98 : vector<8x8xf32> to vector<8x8xbf16>
    %100 = vector.extract_strided_slice %40 {offsets = [0, 16], sizes = [8, 8], strides = [1, 1]} : vector<8x32xf32> to vector<8x8xf32>
    %101 = arith.truncf %100 : vector<8x8xf32> to vector<8x8xbf16>
    %cst_35 = arith.constant dense<0.000000e+00> : vector<8x8xf32>
    %102 = tpu.matmul %97, %99, %cst_35 {dimension_numbers = #tpu.dot_dimension_numbers<[1], [1], [0], [0], [0, 0, 1, 0], [], []>} : vector<8x8xbf16>, vector<8x8xbf16>, vector<8x8xf32> -> vector<8x8xf32>
    %cst_36 = arith.constant -1.000000e+30 : f32
    %103 = vector.broadcast %cst_36 : f32 to vector<8x8xf32>
    %104 = arith.select %43, %102, %103 : vector<8x8xi1>, vector<8x8xf32>
    %cst_37 = arith.constant dense<0xFF800000> : vector<8xf32>
    %105 = vector.multi_reduction <maximumf>, %104, %cst_37 [1] : vector<8x8xf32> to vector<8xf32>
    %106 = vector.shape_cast %105 : vector<8xf32> to vector<8x1xf32>
    %107 = vector.broadcast %106 : vector<8x1xf32> to vector<8x8xf32>
    %108 = arith.subf %104, %107 : vector<8x8xf32>
    %109 = math.exp %108 : vector<8x8xf32>
    %cst_38 = arith.constant dense<0.000000e+00> : vector<8xf32>
    %110 = vector.multi_reduction <add>, %109, %cst_38 [1] : vector<8x8xf32> to vector<8xf32>
    %111 = vector.shape_cast %110 : vector<8xf32> to vector<8x1xf32>
    %112 = tpu.reciprocal %111 {approx = true} : vector<8x1xf32> -> vector<8x1xf32>
    %113 = vector.broadcast %112 : vector<8x1xf32> to vector<8x8xf32>
    %114 = arith.mulf %109, %113 : vector<8x8xf32>
    %115 = arith.truncf %114 : vector<8x8xf32> to vector<8x8xbf16>
    %cst_39 = arith.constant dense<0.000000e+00> : vector<8x8xf32>
    %116 = tpu.matmul %115, %101, %cst_39 {dimension_numbers = #tpu.dot_dimension_numbers<[1], [0], [0], [1], [0, 0, 1, 1], [], []>} : vector<8x8xbf16>, vector<8x8xbf16>, vector<8x8xf32> -> vector<8x8xf32>
    %117 = arith.truncf %116 : vector<8x8xf32> to vector<8x8xbf16>
    %c0_40 = arith.constant 0 : index
    %c16 = arith.constant 16 : index
    %118 = vector.load %arg19[%c0_40, %c16] : memref<8x32xbf16, #tpu.memory_space<vmem>>, vector<8x8xbf16>
    tpu.vector_store %arg19[%c0_40, %c16], %117 {strides = array<i32>} : memref<8x32xbf16, #tpu.memory_space<vmem>>, vector<8x8xbf16>,
    %119 = vector.extract_strided_slice %38 {offsets = [0, 24], sizes = [8, 8], strides = [1, 1]} : vector<8x32xf32> to vector<8x8xf32>
    %cst_41 = arith.constant 0.353553385 : f32
    %120 = vector.broadcast %cst_41 : f32 to vector<8x8xf32>
    %121 = arith.mulf %119, %120 : vector<8x8xf32>
    %122 = arith.truncf %121 : vector<8x8xf32> to vector<8x8xbf16>
    %123 = vector.extract_strided_slice %39 {offsets = [0, 24], sizes = [8, 8], strides = [1, 1]} : vector<8x32xf32> to vector<8x8xf32>
    %124 = arith.truncf %123 : vector<8x8xf32> to vector<8x8xbf16>
    %125 = vector.extract_strided_slice %40 {offsets = [0, 24], sizes = [8, 8], strides = [1, 1]} : vector<8x32xf32> to vector<8x8xf32>
    %126 = arith.truncf %125 : vector<8x8xf32> to vector<8x8xbf16>
    %cst_42 = arith.constant dense<0.000000e+00> : vector<8x8xf32>
    %127 = tpu.matmul %122, %124, %cst_42 {dimension_numbers = #tpu.dot_dimension_numbers<[1], [1], [0], [0], [0, 0, 1, 0], [], []>} : vector<8x8xbf16>, vector<8x8xbf16>, vector<8x8xf32> -> vector<8x8xf32>
    %cst_43 = arith.constant -1.000000e+30 : f32
    %128 = vector.broadcast %cst_43 : f32 to vector<8x8xf32>
    %129 = arith.select %43, %127, %128 : vector<8x8xi1>, vector<8x8xf32>
    %cst_44 = arith.constant dense<0xFF800000> : vector<8xf32>
    %130 = vector.multi_reduction <maximumf>, %129, %cst_44 [1] : vector<8x8xf32> to vector<8xf32>
    %131 = vector.shape_cast %130 : vector<8xf32> to vector<8x1xf32>
    %132 = vector.broadcast %131 : vector<8x1xf32> to vector<8x8xf32>
    %133 = arith.subf %129, %132 : vector<8x8xf32>
    %134 = math.exp %133 : vector<8x8xf32>
    %cst_45 = arith.constant dense<0.000000e+00> : vector<8xf32>
    %135 = vector.multi_reduction <add>, %134, %cst_45 [1] : vector<8x8xf32> to vector<8xf32>
    %136 = vector.shape_cast %135 : vector<8xf32> to vector<8x1xf32>
    %137 = tpu.reciprocal %136 {approx = true} : vector<8x1xf32> -> vector<8x1xf32>
    %138 = vector.broadcast %137 : vector<8x1xf32> to vector<8x8xf32>
    %139 = arith.mulf %134, %138 : vector<8x8xf32>
    %140 = arith.truncf %139 : vector<8x8xf32> to vector<8x8xbf16>
    %cst_46 = arith.constant dense<0.000000e+00> : vector<8x8xf32>
    %141 = tpu.matmul %140, %126, %cst_46 {dimension_numbers = #tpu.dot_dimension_numbers<[1], [0], [0], [1], [0, 0, 1, 1], [], []>} : vector<8x8xbf16>, vector<8x8xbf16>, vector<8x8xf32> -> vector<8x8xf32>
    %142 = arith.truncf %141 : vector<8x8xf32> to vector<8x8xbf16>
    %c0_47 = arith.constant 0 : index
    %c24 = arith.constant 24 : index
    %143 = vector.load %arg19[%c0_47, %c24] : memref<8x32xbf16, #tpu.memory_space<vmem>>, vector<8x8xbf16>
    tpu.vector_store %arg19[%c0_47, %c24], %142 {strides = array<i32>} : memref<8x32xbf16, #tpu.memory_space<vmem>>, vector<8x8xbf16>,
    %c0_48 = arith.constant 0 : index
    %c0_49 = arith.constant 0 : index
    %144 = vector.load %arg19[%c0_48, %c0_49] : memref<8x32xbf16, #tpu.memory_space<vmem>>, vector<8x32xbf16>
    %c0_50 = arith.constant 0 : index
    %c0_51 = arith.constant 0 : index
    %c0_52 = arith.constant 0 : index
    %145 = vector.load %arg7[%c0_50, %c0_51, %c0_52] : memref<1x32x32xbf16, #tpu.memory_space<vmem>>, vector<1x32x32xbf16>
    %146 = vector.shape_cast %145 : vector<1x32x32xbf16> to vector<32x32xbf16>
    %cst_53 = arith.constant dense<0.000000e+00> : vector<8x32xf32>
    %147 = tpu.matmul %144, %146, %cst_53 {dimension_numbers = #tpu.dot_dimension_numbers<[1], [0], [0], [1], [0, 0, 1, 1], [], []>} : vector<8x32xbf16>, vector<32x32xbf16>, vector<8x32xf32> -> vector<8x32xf32>
    %148 = arith.addf %3, %147 : vector<8x32xf32>
    %c0_54 = arith.constant 0 : index
    %c0_55 = arith.constant 0 : index
    %c0_56 = arith.constant 0 : index
    %149 = vector.load %arg8[%c0_54, %c0_55, %c0_56] : memref<1x1x32xf32, #tpu.memory_space<vmem>>, vector<1x1x32xf32>
    %150 = vector.shape_cast %149 : vector<1x1x32xf32> to vector<1x32xf32>
    %151 = vector.broadcast %150 : vector<1x32xf32> to vector<8x32xf32>
    %152 = arith.addf %148, %151 : vector<8x32xf32>
    %c0_57 = arith.constant 0 : index
    %c0_58 = arith.constant 0 : index
    %c0_59 = arith.constant 0 : index
    %153 = vector.load %arg9[%c0_57, %c0_58, %c0_59] : memref<1x1x32xf32, #tpu.memory_space<vmem>>, vector<1x1x32xf32>
    %154 = vector.shape_cast %153 : vector<1x1x32xf32> to vector<1x32xf32>
    %c0_60 = arith.constant 0 : index
    %c0_61 = arith.constant 0 : index
    %c0_62 = arith.constant 0 : index
    %155 = vector.load %arg10[%c0_60, %c0_61, %c0_62] : memref<1x1x32xf32, #tpu.memory_space<vmem>>, vector<1x1x32xf32>
    %156 = vector.shape_cast %155 : vector<1x1x32xf32> to vector<1x32xf32>
    %cst_63 = arith.constant dense<0.000000e+00> : vector<8xf32>
    %157 = vector.multi_reduction <add>, %152, %cst_63 [1] : vector<8x32xf32> to vector<8xf32>
    %158 = vector.shape_cast %157 : vector<8xf32> to vector<8x1xf32>
    %cst_64 = arith.constant 3.200000e+01 : f32
    %159 = vector.broadcast %cst_64 : f32 to vector<8x1xf32>
    %160 = arith.divf %158, %159 : vector<8x1xf32>
    %161 = vector.broadcast %160 : vector<8x1xf32> to vector<8x32xf32>
    %162 = arith.subf %152, %161 : vector<8x32xf32>
    %163 = arith.mulf %162, %162 : vector<8x32xf32>
    %cst_65 = arith.constant dense<0.000000e+00> : vector<8xf32>
    %164 = vector.multi_reduction <add>, %163, %cst_65 [1] : vector<8x32xf32> to vector<8xf32>
    %165 = vector.shape_cast %164 : vector<8xf32> to vector<8x1xf32>
    %cst_66 = arith.constant 3.200000e+01 : f32
    %166 = vector.broadcast %cst_66 : f32 to vector<8x1xf32>
    %167 = arith.divf %165, %166 : vector<8x1xf32>
    %168 = vector.broadcast %160 : vector<8x1xf32> to vector<8x32xf32>
    %169 = arith.subf %152, %168 : vector<8x32xf32>
    %cst_67 = arith.constant 9.99999974E-6 : f32
    %170 = vector.broadcast %cst_67 : f32 to vector<8x1xf32>
    %171 = arith.addf %167, %170 : vector<8x1xf32>
    %172 = math.rsqrt %171 : vector<8x1xf32>
    %173 = vector.broadcast %172 : vector<8x1xf32> to vector<8x32xf32>
    %174 = arith.mulf %169, %173 : vector<8x32xf32>
    %175 = vector.broadcast %154 : vector<1x32xf32> to vector<8x32xf32>
    %176 = arith.mulf %174, %175 : vector<8x32xf32>
    %177 = vector.broadcast %156 : vector<1x32xf32> to vector<8x32xf32>
    %178 = arith.addf %176, %177 : vector<8x32xf32>
    %179 = arith.truncf %178 : vector<8x32xf32> to vector<8x32xbf16>
    %cst_68 = arith.constant 0.000000e+00 : f32
    %180 = vector.broadcast %cst_68 : f32 to vector<8x32xf32>
    %c0_69 = arith.constant 0 : index
    %c0_70 = arith.constant 0 : index
    %c0_71 = arith.constant 0 : index
    %181 = vector.load %arg11[%c0_69, %c0_70, %c0_71] : memref<1x32x128xbf16, #tpu.memory_space<vmem>>, vector<1x32x128xbf16>
    %182 = vector.shape_cast %181 : vector<1x32x128xbf16> to vector<32x128xbf16>
    %cst_72 = arith.constant dense<0.000000e+00> : vector<8x128xf32>
    %183 = tpu.matmul %179, %182, %cst_72 {dimension_numbers = #tpu.dot_dimension_numbers<[1], [0], [0], [1], [0, 0, 1, 1], [], []>} : vector<8x32xbf16>, vector<32x128xbf16>, vector<8x128xf32> -> vector<8x128xf32>
    %c0_73 = arith.constant 0 : index
    %c0_74 = arith.constant 0 : index
    %c0_75 = arith.constant 0 : index
    %184 = vector.load %arg12[%c0_73, %c0_74, %c0_75] : memref<1x1x128xf32, #tpu.memory_space<vmem>>, vector<1x1x128xf32>
    %185 = vector.shape_cast %184 : vector<1x1x128xf32> to vector<1x128xf32>
    %186 = vector.broadcast %185 : vector<1x128xf32> to vector<8x128xf32>
    %187 = arith.addf %183, %186 : vector<8x128xf32>
    %cst_76 = arith.constant 5.000000e-01 : f32
    %188 = vector.broadcast %cst_76 : f32 to vector<8x128xf32>
    %189 = arith.mulf %188, %187 : vector<8x128xf32>
    %cst_77 = arith.constant 4.471500e-02 : f32
    %190 = vector.broadcast %cst_77 : f32 to vector<8x128xf32>
    %191 = arith.mulf %190, %187 : vector<8x128xf32>
    %192 = arith.mulf %191, %187 : vector<8x128xf32>
    %193 = arith.mulf %192, %187 : vector<8x128xf32>
    %194 = arith.addf %187, %193 : vector<8x128xf32>
    %cst_78 = arith.constant 0.797884583 : f32
    %195 = vector.broadcast %cst_78 : f32 to vector<8x128xf32>
    %196 = arith.mulf %195, %194 : vector<8x128xf32>
    %197 = math.tanh %196 : vector<8x128xf32>
    %cst_79 = arith.constant 1.000000e+00 : f32
    %198 = vector.broadcast %cst_79 : f32 to vector<8x128xf32>
    %199 = arith.addf %198, %197 : vector<8x128xf32>
    %200 = arith.mulf %189, %199 : vector<8x128xf32>
    %201 = arith.truncf %200 : vector<8x128xf32> to vector<8x128xbf16>
    %c0_80 = arith.constant 0 : index
    %c0_81 = arith.constant 0 : index
    %c0_82 = arith.constant 0 : index
    %202 = vector.load %arg13[%c0_80, %c0_81, %c0_82] : memref<1x128x32xbf16, #tpu.memory_space<vmem>>, vector<1x128x32xbf16>
    %203 = vector.shape_cast %202 : vector<1x128x32xbf16> to vector<128x32xbf16>
    %cst_83 = arith.constant dense<0.000000e+00> : vector<8x32xf32>
    %204 = tpu.matmul %201, %203, %cst_83 {dimension_numbers = #tpu.dot_dimension_numbers<[1], [0], [0], [1], [0, 0, 1, 1], [], []>} : vector<8x128xbf16>, vector<128x32xbf16>, vector<8x32xf32> -> vector<8x32xf32>
    %205 = arith.addf %180, %204 : vector<8x32xf32>
    %206 = arith.addf %152, %205 : vector<8x32xf32>
    %c0_84 = arith.constant 0 : index
    %c0_85 = arith.constant 0 : index
    %c0_86 = arith.constant 0 : index
    %207 = vector.load %arg14[%c0_84, %c0_85, %c0_86] : memref<1x1x32xf32, #tpu.memory_space<vmem>>, vector<1x1x32xf32>
    %208 = vector.shape_cast %207 : vector<1x1x32xf32> to vector<1x32xf32>
    %209 = vector.broadcast %208 : vector<1x32xf32> to vector<8x32xf32>
    %210 = arith.addf %206, %209 : vector<8x32xf32>
    %c0_87 = arith.constant 0 : index
    %c0_88 = arith.constant 0 : index
    %211 = vector.load %arg18[%c0_87, %c0_88] : memref<8x32xf32, #tpu.memory_space<vmem>>, vector<8x32xf32>
    tpu.vector_store %arg18[%c0_87, %c0_88], %210 {strides = array<i32>} : memref<8x32xf32, #tpu.memory_space<vmem>>, vector<8x32xf32>,
    %c1_i32 = arith.constant 1 : i32
    %212 = arith.cmpi eq, %arg1, %c1_i32 : i32
    %213 = arith.extui %212 : i1 to i32
    %c0_i32_89 = arith.constant 0 : i32
    %214 = arith.cmpi ne, %213, %c0_i32_89 : i32
    scf.if %214 {
      %c0_90 = arith.constant 0 : index
      %c0_91 = arith.constant 0 : index
      %215 = vector.load %arg15[%c0_90, %c0_91] : memref<1x32xf32, #tpu.memory_space<vmem>>, vector<1x32xf32>
      %c0_92 = arith.constant 0 : index
      %c0_93 = arith.constant 0 : index
      %216 = vector.load %arg16[%c0_92, %c0_93] : memref<1x32xf32, #tpu.memory_space<vmem>>, vector<1x32xf32>
      %cst_94 = arith.constant dense<0.000000e+00> : vector<8xf32>
      %217 = vector.multi_reduction <add>, %210, %cst_94 [1] : vector<8x32xf32> to vector<8xf32>
      %218 = vector.shape_cast %217 : vector<8xf32> to vector<8x1xf32>
      %cst_95 = arith.constant 3.200000e+01 : f32
      %219 = vector.broadcast %cst_95 : f32 to vector<8x1xf32>
      %220 = arith.divf %218, %219 : vector<8x1xf32>
      %221 = vector.broadcast %220 : vector<8x1xf32> to vector<8x32xf32>
      %222 = arith.subf %210, %221 : vector<8x32xf32>
      %223 = arith.mulf %222, %222 : vector<8x32xf32>
      %cst_96 = arith.constant dense<0.000000e+00> : vector<8xf32>
      %224 = vector.multi_reduction <add>, %223, %cst_96 [1] : vector<8x32xf32> to vector<8xf32>
      %225 = vector.shape_cast %224 : vector<8xf32> to vector<8x1xf32>
      %cst_97 = arith.constant 3.200000e+01 : f32
      %226 = vector.broadcast %cst_97 : f32 to vector<8x1xf32>
      %227 = arith.divf %225, %226 : vector<8x1xf32>
      %228 = vector.broadcast %220 : vector<8x1xf32> to vector<8x32xf32>
      %229 = arith.subf %210, %228 : vector<8x32xf32>
      %cst_98 = arith.constant 9.99999974E-6 : f32
      %230 = vector.broadcast %cst_98 : f32 to vector<8x1xf32>
      %231 = arith.addf %227, %230 : vector<8x1xf32>
      %232 = math.rsqrt %231 : vector<8x1xf32>
      %233 = vector.broadcast %232 : vector<8x1xf32> to vector<8x32xf32>
      %234 = arith.mulf %229, %233 : vector<8x32xf32>
      %235 = vector.broadcast %215 : vector<1x32xf32> to vector<8x32xf32>
      %236 = arith.mulf %234, %235 : vector<8x32xf32>
      %237 = vector.broadcast %216 : vector<1x32xf32> to vector<8x32xf32>
      %238 = arith.addf %236, %237 : vector<8x32xf32>
      %239 = arith.truncf %238 : vector<8x32xf32> to vector<8x32xbf16>
      %c0_99 = arith.constant 0 : index
      %c0_100 = arith.constant 0 : index
      %c0_101 = arith.constant 0 : index
      %240 = vector.load %arg17[%c0_99, %c0_100, %c0_101] : memref<1x8x32xbf16, #tpu.memory_space<vmem>>, vector<1x8x32xbf16>
      %241 = vector.shape_cast %240 : vector<1x8x32xbf16> to vector<8x32xbf16>
      %242 = vector.shape_cast %239 : vector<8x32xbf16> to vector<1x8x32xbf16>
      tpu.vector_store %arg17[%c0_99, %c0_100, %c0_101], %242 {strides = array<i32>} : memref<1x8x32xbf16, #tpu.memory_space<vmem>>, vector<1x8x32xbf16>,
    } else {
    }
    return
  }
  func.func @transform_0(%arg0: i32, %arg1: i32) -> (i32, i32, i32) {
    %c0_i32 = arith.constant 0 : i32
    %c0_i32_0 = arith.constant 0 : i32
    %c0_i32_1 = arith.constant 0 : i32
    return %arg0, %c0_i32, %c0_i32_0 : i32, i32, i32
  }
  func.func @transform_1(%arg0: i32, %arg1: i32) -> (i32, i32, i32) {
    %c0_i32 = arith.constant 0 : i32
    %c0_i32_0 = arith.constant 0 : i32
    %c0_i32_1 = arith.constant 0 : i32
    return %arg1, %c0_i32, %c0_i32_0 : i32, i32, i32
  }
  func.func @transform_2(%arg0: i32, %arg1: i32) -> (i32, i32, i32) {
    %c0_i32 = arith.constant 0 : i32
    %c0_i32_0 = arith.constant 0 : i32
    %c0_i32_1 = arith.constant 0 : i32
    return %arg1, %c0_i32, %c0_i32_0 : i32, i32, i32
  }
  func.func @transform_3(%arg0: i32, %arg1: i32) -> (i32, i32, i32) {
    %c0_i32 = arith.constant 0 : i32
    %c0_i32_0 = arith.constant 0 : i32
    %c0_i32_1 = arith.constant 0 : i32
    return %arg1, %c0_i32, %c0_i32_0 : i32, i32, i32
  }
  func.func @transform_4(%arg0: i32, %arg1: i32) -> (i32, i32, i32) {
    %c0_i32 = arith.constant 0 : i32
    %c0_i32_0 = arith.constant 0 : i32
    %c0_i32_1 = arith.constant 0 : i32
    return %arg1, %c0_i32, %c0_i32_0 : i32, i32, i32
  }
  func.func @transform_5(%arg0: i32, %arg1: i32) -> (i32, i32, i32) {
    %c0_i32 = arith.constant 0 : i32
    %c0_i32_0 = arith.constant 0 : i32
    %c0_i32_1 = arith.constant 0 : i32
    return %arg1, %c0_i32, %c0_i32_0 : i32, i32, i32
  }
  func.func @transform_6(%arg0: i32, %arg1: i32) -> (i32, i32, i32) {
    %c0_i32 = arith.constant 0 : i32
    %c0_i32_0 = arith.constant 0 : i32
    %c0_i32_1 = arith.constant 0 : i32
    return %arg1, %c0_i32, %c0_i32_0 : i32, i32, i32
  }
  func.func @transform_7(%arg0: i32, %arg1: i32) -> (i32, i32, i32) {
    %c0_i32 = arith.constant 0 : i32
    %c0_i32_0 = arith.constant 0 : i32
    %c0_i32_1 = arith.constant 0 : i32
    return %arg1, %c0_i32, %c0_i32_0 : i32, i32, i32
  }
  func.func @transform_8(%arg0: i32, %arg1: i32) -> (i32, i32, i32) {
    %c0_i32 = arith.constant 0 : i32
    %c0_i32_0 = arith.constant 0 : i32
    %c0_i32_1 = arith.constant 0 : i32
    return %arg1, %c0_i32, %c0_i32_0 : i32, i32, i32
  }
  func.func @transform_9(%arg0: i32, %arg1: i32) -> (i32, i32, i32) {
    %c0_i32 = arith.constant 0 : i32
    %c0_i32_0 = arith.constant 0 : i32
    %c0_i32_1 = arith.constant 0 : i32
    return %arg1, %c0_i32, %c0_i32_0 : i32, i32, i32
  }
  func.func @transform_10(%arg0: i32, %arg1: i32) -> (i32, i32, i32) {
    %c0_i32 = arith.constant 0 : i32
    %c0_i32_0 = arith.constant 0 : i32
    %c0_i32_1 = arith.constant 0 : i32
    return %arg1, %c0_i32, %c0_i32_0 : i32, i32, i32
  }
  func.func @transform_11(%arg0: i32, %arg1: i32) -> (i32, i32, i32) {
    %c0_i32 = arith.constant 0 : i32
    %c0_i32_0 = arith.constant 0 : i32
    %c0_i32_1 = arith.constant 0 : i32
    return %arg1, %c0_i32, %c0_i32_0 : i32, i32, i32
  }
  func.func @transform_12(%arg0: i32, %arg1: i32) -> (i32, i32, i32) {
    %c0_i32 = arith.constant 0 : i32
    %c0_i32_0 = arith.constant 0 : i32
    %c0_i32_1 = arith.constant 0 : i32
    return %arg1, %c0_i32, %c0_i32_0 : i32, i32, i32
  }
  func.func @transform_13(%arg0: i32, %arg1: i32) -> (i32, i32) {
    %c0_i32 = arith.constant 0 : i32
    %c0_i32_0 = arith.constant 0 : i32
    %c0_i32_1 = arith.constant 0 : i32
    return %c0_i32, %c0_i32_0 : i32, i32
  }
  func.func @transform_14(%arg0: i32, %arg1: i32) -> (i32, i32) {
    %c0_i32 = arith.constant 0 : i32
    %c0_i32_0 = arith.constant 0 : i32
    %c0_i32_1 = arith.constant 0 : i32
    return %c0_i32, %c0_i32_0 : i32, i32
  }
  func.func @transform_15(%arg0: i32, %arg1: i32) -> (i32, i32, i32) {
    %c0_i32 = arith.constant 0 : i32
    %c0_i32_0 = arith.constant 0 : i32
    %c0_i32_1 = arith.constant 0 : i32
    return %arg0, %c0_i32, %c0_i32_0 : i32, i32, i32
  }
}

</mosaic_0001>

<llo_original>
// kernel: tpu_custom_call.1
$region0: #{tpu_custom_call.1}
  #allocation0 [shape = 'u32[]', space=smem, size = 0x4, offset = 0x4, fixed_abs, tag = 'smem constant byte address 0x4 - core index']
  #allocation1 [shape = 'u32[72,128]{1,0:T(1,128)}', space=vmem, size = 0x9000, scoped, tag = 'internal scratch']
  #allocation2 [shape = 'f32[8,32]{1,0:T(8,128)}', space=vmem, size = 0x1000, scoped, tag = 'scratch operand']
  #allocation3 [shape = 'bf16[8,32]{1,0:T(8,128)(2,1)}', space=vmem, size = 0x800, scoped, tag = 'scratch operand']
  %s0 = inlined_call_operand.vmem [shape: bf16[2,8,32], index: 0, kind: input, shape index: {}]
  %s1 = inlined_call_operand.vmem [shape: f32[2,1,32], index: 1, kind: input, shape index: {}]
  %s2 = inlined_call_operand.vmem [shape: f32[2,1,32], index: 2, kind: input, shape index: {}]
  %s3 = inlined_call_operand.vmem [shape: bf16[2,32,96], index: 3, kind: input, shape index: {}]
  %s4 = inlined_call_operand.vmem [shape: f32[2,1,96], index: 4, kind: input, shape index: {}]
  %s5 = inlined_call_operand.vmem [shape: bf16[2,32,32], index: 5, kind: input, shape index: {}]
  %s6 = inlined_call_operand.vmem [shape: f32[2,1,32], index: 6, kind: input, shape index: {}]
  %s7 = inlined_call_operand.vmem [shape: f32[2,1,32], index: 7, kind: input, shape index: {}]
  %s8 = inlined_call_operand.vmem [shape: f32[2,1,32], index: 8, kind: input, shape index: {}]
  %s9 = inlined_call_operand.vmem [shape: bf16[2,32,128], index: 9, kind: input, shape index: {}]
  %s10 = inlined_call_operand.vmem [shape: f32[2,1,128], index: 10, kind: input, shape index: {}]
  %s11 = inlined_call_operand.vmem [shape: bf16[2,128,32], index: 11, kind: input, shape index: {}]
  %s12 = inlined_call_operand.vmem [shape: f32[2,1,32], index: 12, kind: input, shape index: {}]
  %s13 = inlined_call_operand.vmem [shape: f32[1,32], index: 13, kind: input, shape index: {}]
  %s14 = inlined_call_operand.vmem [shape: f32[1,32], index: 14, kind: input, shape index: {}]
  %s15 = inlined_call_operand.hbm [shape: bf16[2,8,32], index: 15, kind: output, shape index: {}]
  %s16 = sld [smem:[#allocation0]]
  $region101: #{tpu_custom_call.1} parent=0
    _
  %s18 = ssub.s32 1, %s16
  %s19 = scalar_select 0, %s18, %s16
  $region1: #{tpu_custom_call.1} parent=0
    #allocation4 [shape = 'u8[4096]{0}', space=vmem, size = 0x1000, scoped, tag = 'output window, operand 0']
    #allocation5 [shape = 's32[2]{0}', space=sflag, size = 0x8, scoped, tag = 'scoped memory for tpu_custom_call.1']
    %20 = vsyncpa [#allocation5], 0
    %s21 = scalar_lea.sflag [#allocation5], 1
    %22 = vsyncpa %s21, 0
    loop: start=0, step=1, limit=6
    $region2: #{tpu_custom_call.1} parent=1 // loop_pre_header
      _
    $region3: #{tpu_custom_call.1} parent=1 // loop_header
      %s24 = sphi 0, %s28
      %p25 = scmp.ge.s32.totalorder %s24, 6
      %s31 = sphi 0, %s43
      %s32 = sphi 0, %s39
      %s33 = sphi 0, %s31
      %s34 = sphi 0, %s32
      %s35 = sphi 0, %s33
      %s36 = sphi 0, %s34
      %s46 = sphi 0, %s48
      %s49 = sphi 0, %s46
      %s50 = sphi 0, %s49
      %s66 = sphi 0, %s50
      %s72 = sphi 0, %s74
      %s75 = sphi 0, %s72
      %s76 = sphi 0, %s75
      %s92 = sphi 0, %s76
      %s98 = sphi 0, %s100
      %s101 = sphi 0, %s98
      %s102 = sphi 0, %s101
      %s118 = sphi 0, %s102
      %s124 = sphi 0, %s126
      %s127 = sphi 0, %s124
      %s128 = sphi 0, %s127
      %s144 = sphi 0, %s128
      %s150 = sphi 0, %s152
      %s153 = sphi 0, %s150
      %s154 = sphi 0, %s153
      %s170 = sphi 0, %s154
      %s176 = sphi 0, %s178
      %s179 = sphi 0, %s176
      %s180 = sphi 0, %s179
      %s196 = sphi 0, %s180
      %s202 = sphi 0, %s204
      %s205 = sphi 0, %s202
      %s206 = sphi 0, %s205
      %s222 = sphi 0, %s206
      %s228 = sphi 0, %s230
      %s231 = sphi 0, %s228
      %s232 = sphi 0, %s231
      %s248 = sphi 0, %s232
      %s254 = sphi 0, %s256
      %s257 = sphi 0, %s254
      %s258 = sphi 0, %s257
      %s274 = sphi 0, %s258
      %s280 = sphi 0, %s282
      %s283 = sphi 0, %s280
      %s284 = sphi 0, %s283
      %s300 = sphi 0, %s284
      %s306 = sphi 0, %s308
      %s309 = sphi 0, %s306
      %s310 = sphi 0, %s309
      %s326 = sphi 0, %s310
      %s332 = sphi 0, %s334
      %s335 = sphi 0, %s332
      %s336 = sphi 0, %s335
      %s352 = sphi 0, %s336
      %s358 = sphi 0, %s360
      %s361 = sphi 0, %s358
      %s362 = sphi 0, %s361
      %s378 = sphi 0, %s362
      %s382 = sphi 0, %s382
      %s384 = sphi 0, %s382
      %s385 = sphi 0, %s384
      %s399 = sphi 0, %s385
      %s403 = sphi 0, %s403
      %s405 = sphi 0, %s403
      %s406 = sphi 0, %s405
      %s420 = sphi 0, %s406
      %s426 = sphi 0, %s428
      %s429 = sphi 0, %s426
      %s430 = sphi 0, %s429
      %s446 = sphi 0, %s430
    $region4: #{tpu_custom_call.1} parent=1 // loop_header_branch
      %27 = sbr.rel (%p25) target = $region8
    $region5: #{tpu_custom_call.1} parent=1 // loop_body
      %s29 = ssub.s32 %s24, 1
      %s30 = ssub.s32 %s24, 2
      %s37 = sadd.s32 1, %s32
      %p38 = scmp.ge.s32.totalorder %s37, 2
      %s39 = scalar_select %p38, 0, %s37
      %s40 = sadd.s32 1, %s31
      %s41 = scalar_select %p38, %s40, %s31
      %p42 = scmp.ge.s32.totalorder %s41, 2
      %s43 = scalar_select %p42, 0, %s41
      %s44 = ssub.s32 %s31, %s43
      %p45 = scmp.eq.s32.totalorder %s44, 0
      %s47 = sadd.s32 %s46, 1
      %s48 = scalar_select %p45, %s46, %s47
      %p51 = pneg %p45
      %p52 = scmp.eq.s32.totalorder %s24, 3
      %p53 = por %p51, %p52
      %p54 = scmp.ne.s32.totalorder %s46, %s49
      %p55 = scmp.eq.s32.totalorder %s24, 0
      %p56 = por %p54, %p55
      %p57 = scmp.ne.s32.totalorder %s46, %s49
      %p58 = scmp.eq.s32.totalorder %s29, 3
      %p59 = por %p57, %p58
      %p60 = scmp.ne.s32.totalorder %s49, %s50
      %p61 = scmp.eq.s32.totalorder %s29, 0
      %p62 = por %p60, %p61
      %p63 = scmp.ne.s32.totalorder %s49, %s50
      %p64 = scmp.eq.s32.totalorder %s30, 3
      %p65 = por %p63, %p64
      %p67 = scmp.ne.s32.totalorder %s50, %s66
      %p68 = scmp.eq.s32.totalorder %s30, 0
      %p69 = por %p67, %p68
      %s70 = ssub.s32 %s32, %s39
      %p71 = scmp.eq.s32.totalorder %s70, 0
      %s73 = sadd.s32 %s72, 1
      %s74 = scalar_select %p71, %s72, %s73
      %p77 = pneg %p71
      %p78 = scmp.eq.s32.totalorder %s24, 3
      %p79 = por %p77, %p78
      %p80 = scmp.ne.s32.totalorder %s72, %s75
      %p81 = scmp.eq.s32.totalorder %s24, 0
      %p82 = por %p80, %p81
      %p83 = scmp.ne.s32.totalorder %s72, %s75
      %p84 = scmp.eq.s32.totalorder %s29, 3
      %p85 = por %p83, %p84
      %p86 = scmp.ne.s32.totalorder %s75, %s76
      %p87 = scmp.eq.s32.totalorder %s29, 0
      %p88 = por %p86, %p87
      %p89 = scmp.ne.s32.totalorder %s75, %s76
      %p90 = scmp.eq.s32.totalorder %s30, 3
      %p91 = por %p89, %p90
      %p93 = scmp.ne.s32.totalorder %s76, %s92
      %p94 = scmp.eq.s32.totalorder %s30, 0
      %p95 = por %p93, %p94
      %s96 = ssub.s32 %s32, %s39
      %p97 = scmp.eq.s32.totalorder %s96, 0
      %s99 = sadd.s32 %s98, 1
      %s100 = scalar_select %p97, %s98, %s99
      %p103 = pneg %p97
      %p104 = scmp.eq.s32.totalorder %s24, 3
      %p105 = por %p103, %p104
      %p106 = scmp.ne.s32.totalorder %s98, %s101
      %p107 = scmp.eq.s32.totalorder %s24, 0
      %p108 = por %p106, %p107
      %p109 = scmp.ne.s32.totalorder %s98, %s101
      %p110 = scmp.eq.s32.totalorder %s29, 3
      %p111 = por %p109, %p110
      %p112 = scmp.ne.s32.totalorder %s101, %s102
      %p113 = scmp.eq.s32.totalorder %s29, 0
      %p114 = por %p112, %p113
      %p115 = scmp.ne.s32.totalorder %s101, %s102
      %p116 = scmp.eq.s32.totalorder %s30, 3
      %p117 = por %p115, %p116
      %p119 = scmp.ne.s32.totalorder %s102, %s118
      %p120 = scmp.eq.s32.totalorder %s30, 0
      %p121 = por %p119, %p120
      %s122 = ssub.s32 %s32, %s39
      %p123 = scmp.eq.s32.totalorder %s122, 0
      %s125 = sadd.s32 %s124, 1
      %s126 = scalar_select %p123, %s124, %s125
      %p129 = pneg %p123
      %p130 = scmp.eq.s32.totalorder %s24, 3
      %p131 = por %p129, %p130
      %p132 = scmp.ne.s32.totalorder %s124, %s127
      %p133 = scmp.eq.s32.totalorder %s24, 0
      %p134 = por %p132, %p133
      %p135 = scmp.ne.s32.totalorder %s124, %s127
      %p136 = scmp.eq.s32.totalorder %s29, 3
      %p137 = por %p135, %p136
      %p138 = scmp.ne.s32.totalorder %s127, %s128
      %p139 = scmp.eq.s32.totalorder %s29, 0
      %p140 = por %p138, %p139
      %p141 = scmp.ne.s32.totalorder %s127, %s128
      %p142 = scmp.eq.s32.totalorder %s30, 3
      %p143 = por %p141, %p142
      %p145 = scmp.ne.s32.totalorder %s128, %s144
      %p146 = scmp.eq.s32.totalorder %s30, 0
      %p147 = por %p145, %p146
      %s148 = ssub.s32 %s32, %s39
      %p149 = scmp.eq.s32.totalorder %s148, 0
      %s151 = sadd.s32 %s150, 1
      %s152 = scalar_select %p149, %s150, %s151
      %p155 = pneg %p149
      %p156 = scmp.eq.s32.totalorder %s24, 3
      %p157 = por %p155, %p156
      %p158 = scmp.ne.s32.totalorder %s150, %s153
      %p159 = scmp.eq.s32.totalorder %s24, 0
      %p160 = por %p158, %p159
      %p161 = scmp.ne.s32.totalorder %s150, %s153
      %p162 = scmp.eq.s32.totalorder %s29, 3
      %p163 = por %p161, %p162
      %p164 = scmp.ne.s32.totalorder %s153, %s154
      %p165 = scmp.eq.s32.totalorder %s29, 0
      %p166 = por %p164, %p165
      %p167 = scmp.ne.s32.totalorder %s153, %s154
      %p168 = scmp.eq.s32.totalorder %s30, 3
      %p169 = por %p167, %p168
      %p171 = scmp.ne.s32.totalorder %s154, %s170
      %p172 = scmp.eq.s32.totalorder %s30, 0
      %p173 = por %p171, %p172
      %s174 = ssub.s32 %s32, %s39
      %p175 = scmp.eq.s32.totalorder %s174, 0
      %s177 = sadd.s32 %s176, 1
      %s178 = scalar_select %p175, %s176, %s177
      %p181 = pneg %p175
      %p182 = scmp.eq.s32.totalorder %s24, 3
      %p183 = por %p181, %p182
      %p184 = scmp.ne.s32.totalorder %s176, %s179
      %p185 = scmp.eq.s32.totalorder %s24, 0
      %p186 = por %p184, %p185
      %p187 = scmp.ne.s32.totalorder %s176, %s179
      %p188 = scmp.eq.s32.totalorder %s29, 3
      %p189 = por %p187, %p188
      %p190 = scmp.ne.s32.totalorder %s179, %s180
      %p191 = scmp.eq.s32.totalorder %s29, 0
      %p192 = por %p190, %p191
      %p193 = scmp.ne.s32.totalorder %s179, %s180
      %p194 = scmp.eq.s32.totalorder %s30, 3
      %p195 = por %p193, %p194
      %p197 = scmp.ne.s32.totalorder %s180, %s196
      %p198 = scmp.eq.s32.totalorder %s30, 0
      %p199 = por %p197, %p198
      %s200 = ssub.s32 %s32, %s39
      %p201 = scmp.eq.s32.totalorder %s200, 0
      %s203 = sadd.s32 %s202, 1
      %s204 = scalar_select %p201, %s202, %s203
      %p207 = pneg %p201
      %p208 = scmp.eq.s32.totalorder %s24, 3
      %p209 = por %p207, %p208
      %p210 = scmp.ne.s32.totalorder %s202, %s205
      %p211 = scmp.eq.s32.totalorder %s24, 0
      %p212 = por %p210, %p211
      %p213 = scmp.ne.s32.totalorder %s202, %s205
      %p214 = scmp.eq.s32.totalorder %s29, 3
      %p215 = por %p213, %p214
      %p216 = scmp.ne.s32.totalorder %s205, %s206
      %p217 = scmp.eq.s32.totalorder %s29, 0
      %p218 = por %p216, %p217
      %p219 = scmp.ne.s32.totalorder %s205, %s206
      %p220 = scmp.eq.s32.totalorder %s30, 3
      %p221 = por %p219, %p220
      %p223 = scmp.ne.s32.totalorder %s206, %s222
      %p224 = scmp.eq.s32.totalorder %s30, 0
      %p225 = por %p223, %p224
      %s226 = ssub.s32 %s32, %s39
      %p227 = scmp.eq.s32.totalorder %s226, 0
      %s229 = sadd.s32 %s228, 1
      %s230 = scalar_select %p227, %s228, %s229
      %p233 = pneg %p227
      %p234 = scmp.eq.s32.totalorder %s24, 3
      %p235 = por %p233, %p234
      %p236 = scmp.ne.s32.totalorder %s228, %s231
      %p237 = scmp.eq.s32.totalorder %s24, 0
      %p238 = por %p236, %p237
      %p239 = scmp.ne.s32.totalorder %s228, %s231
      %p240 = scmp.eq.s32.totalorder %s29, 3
      %p241 = por %p239, %p240
      %p242 = scmp.ne.s32.totalorder %s231, %s232
      %p243 = scmp.eq.s32.totalorder %s29, 0
      %p244 = por %p242, %p243
      %p245 = scmp.ne.s32.totalorder %s231, %s232
      %p246 = scmp.eq.s32.totalorder %s30, 3
      %p247 = por %p245, %p246
      %p249 = scmp.ne.s32.totalorder %s232, %s248
      %p250 = scmp.eq.s32.totalorder %s30, 0
      %p251 = por %p249, %p250
      %s252 = ssub.s32 %s32, %s39
      %p253 = scmp.eq.s32.totalorder %s252, 0
      %s255 = sadd.s32 %s254, 1
      %s256 = scalar_select %p253, %s254, %s255
      %p259 = pneg %p253
      %p260 = scmp.eq.s32.totalorder %s24, 3
      %p261 = por %p259, %p260
      %p262 = scmp.ne.s32.totalorder %s254, %s257
      %p263 = scmp.eq.s32.totalorder %s24, 0
      %p264 = por %p262, %p263
      %p265 = scmp.ne.s32.totalorder %s254, %s257
      %p266 = scmp.eq.s32.totalorder %s29, 3
      %p267 = por %p265, %p266
      %p268 = scmp.ne.s32.totalorder %s257, %s258
      %p269 = scmp.eq.s32.totalorder %s29, 0
      %p270 = por %p268, %p269
      %p271 = scmp.ne.s32.totalorder %s257, %s258
      %p272 = scmp.eq.s32.totalorder %s30, 3
      %p273 = por %p271, %p272
      %p275 = scmp.ne.s32.totalorder %s258, %s274
      %p276 = scmp.eq.s32.totalorder %s30, 0
      %p277 = por %p275, %p276
      %s278 = ssub.s32 %s32, %s39
      %p279 = scmp.eq.s32.totalorder %s278, 0
      %s281 = sadd.s32 %s280, 1
      %s282 = scalar_select %p279, %s280, %s281
      %p285 = pneg %p279
      %p286 = scmp.eq.s32.totalorder %s24, 3
      %p287 = por %p285, %p286
      %p288 = scmp.ne.s32.totalorder %s280, %s283
      %p289 = scmp.eq.s32.totalorder %s24, 0
      %p290 = por %p288, %p289
      %p291 = scmp.ne.s32.totalorder %s280, %s283
      %p292 = scmp.eq.s32.totalorder %s29, 3
      %p293 = por %p291, %p292
      %p294 = scmp.ne.s32.totalorder %s283, %s284
      %p295 = scmp.eq.s32.totalorder %s29, 0
      %p296 = por %p294, %p295
      %p297 = scmp.ne.s32.totalorder %s283, %s284
      %p298 = scmp.eq.s32.totalorder %s30, 3
      %p299 = por %p297, %p298
      %p301 = scmp.ne.s32.totalorder %s284, %s300
      %p302 = scmp.eq.s32.totalorder %s30, 0
      %p303 = por %p301, %p302
      %s304 = ssub.s32 %s32, %s39
      %p305 = scmp.eq.s32.totalorder %s304, 0
      %s307 = sadd.s32 %s306, 1
      %s308 = scalar_select %p305, %s306, %s307
      %p311 = pneg %p305
      %p312 = scmp.eq.s32.totalorder %s24, 3
      %p313 = por %p311, %p312
      %p314 = scmp.ne.s32.totalorder %s306, %s309
      %p315 = scmp.eq.s32.totalorder %s24, 0
      %p316 = por %p314, %p315
      %p317 = scmp.ne.s32.totalorder %s306, %s309
      %p318 = scmp.eq.s32.totalorder %s29, 3
      %p319 = por %p317, %p318
      %p320 = scmp.ne.s32.totalorder %s309, %s310
      %p321 = scmp.eq.s32.totalorder %s29, 0
      %p322 = por %p320, %p321
      %p323 = scmp.ne.s32.totalorder %s309, %s310
      %p324 = scmp.eq.s32.totalorder %s30, 3
      %p325 = por %p323, %p324
      %p327 = scmp.ne.s32.totalorder %s310, %s326
      %p328 = scmp.eq.s32.totalorder %s30, 0
      %p329 = por %p327, %p328
      %s330 = ssub.s32 %s32, %s39
      %p331 = scmp.eq.s32.totalorder %s330, 0
      %s333 = sadd.s32 %s332, 1
      %s334 = scalar_select %p331, %s332, %s333
      %p337 = pneg %p331
      %p338 = scmp.eq.s32.totalorder %s24, 3
      %p339 = por %p337, %p338
      %p340 = scmp.ne.s32.totalorder %s332, %s335
      %p341 = scmp.eq.s32.totalorder %s24, 0
      %p342 = por %p340, %p341
      %p343 = scmp.ne.s32.totalorder %s332, %s335
      %p344 = scmp.eq.s32.totalorder %s29, 3
      %p345 = por %p343, %p344
      %p346 = scmp.ne.s32.totalorder %s335, %s336
      %p347 = scmp.eq.s32.totalorder %s29, 0
      %p348 = por %p346, %p347
      %p349 = scmp.ne.s32.totalorder %s335, %s336
      %p350 = scmp.eq.s32.totalorder %s30, 3
      %p351 = por %p349, %p350
      %p353 = scmp.ne.s32.totalorder %s336, %s352
      %p354 = scmp.eq.s32.totalorder %s30, 0
      %p355 = por %p353, %p354
      %s356 = ssub.s32 %s32, %s39
      %p357 = scmp.eq.s32.totalorder %s356, 0
      %s359 = sadd.s32 %s358, 1
      %s360 = scalar_select %p357, %s358, %s359
      %p363 = pneg %p357
      %p364 = scmp.eq.s32.totalorder %s24, 3
      %p365 = por %p363, %p364
      %p366 = scmp.ne.s32.totalorder %s358, %s361
      %p367 = scmp.eq.s32.totalorder %s24, 0
      %p368 = por %p366, %p367
      %p369 = scmp.ne.s32.totalorder %s358, %s361
      %p370 = scmp.eq.s32.totalorder %s29, 3
      %p371 = por %p369, %p370
      %p372 = scmp.ne.s32.totalorder %s361, %s362
      %p373 = scmp.eq.s32.totalorder %s29, 0
      %p374 = por %p372, %p373
      %p375 = scmp.ne.s32.totalorder %s361, %s362
      %p376 = scmp.eq.s32.totalorder %s30, 3
      %p377 = por %p375, %p376
      %p379 = scmp.ne.s32.totalorder %s362, %s378
      %p380 = scmp.eq.s32.totalorder %s30, 0
      %p381 = por %p379, %p380
      %s383 = sadd.s32 %s382, 1
      %p386 = scmp.eq.s32.totalorder %s24, 3
      %p387 = scmp.ne.s32.totalorder %s382, %s384
      %p388 = scmp.eq.s32.totalorder %s24, 0
      %p389 = por %p387, %p388
      %p390 = scmp.ne.s32.totalorder %s382, %s384
      %p391 = scmp.eq.s32.totalorder %s29, 3
      %p392 = por %p390, %p391
      %p393 = scmp.ne.s32.totalorder %s384, %s385
      %p394 = scmp.eq.s32.totalorder %s29, 0
      %p395 = por %p393, %p394
      %p396 = scmp.ne.s32.totalorder %s384, %s385
      %p397 = scmp.eq.s32.totalorder %s30, 3
      %p398 = por %p396, %p397
      %p400 = scmp.ne.s32.totalorder %s385, %s399
      %p401 = scmp.eq.s32.totalorder %s30, 0
      %p402 = por %p400, %p401
      %s404 = sadd.s32 %s403, 1
      %p407 = scmp.eq.s32.totalorder %s24, 3
      %p408 = scmp.ne.s32.totalorder %s403, %s405
      %p409 = scmp.eq.s32.totalorder %s24, 0
      %p410 = por %p408, %p409
      %p411 = scmp.ne.s32.totalorder %s403, %s405
      %p412 = scmp.eq.s32.totalorder %s29, 3
      %p413 = por %p411, %p412
      %p414 = scmp.ne.s32.totalorder %s405, %s406
      %p415 = scmp.eq.s32.totalorder %s29, 0
      %p416 = por %p414, %p415
      %p417 = scmp.ne.s32.totalorder %s405, %s406
      %p418 = scmp.eq.s32.totalorder %s30, 3
      %p419 = por %p417, %p418
      %p421 = scmp.ne.s32.totalorder %s406, %s420
      %p422 = scmp.eq.s32.totalorder %s30, 0
      %p423 = por %p421, %p422
      %s424 = ssub.s32 %s31, %s43
      %p425 = scmp.eq.s32.totalorder %s424, 0
      %s427 = sadd.s32 %s426, 1
      %s428 = scalar_select %p425, %s426, %s427
      %p431 = pneg %p425
      %p432 = scmp.eq.s32.totalorder %s24, 3
      %p433 = por %p431, %p432
      %p434 = scmp.ne.s32.totalorder %s426, %s429
      %p435 = scmp.eq.s32.totalorder %s24, 0
      %p436 = por %p434, %p435
      %p437 = scmp.ne.s32.totalorder %s426, %s429
      %p438 = scmp.eq.s32.totalorder %s29, 3
      %p439 = por %p437, %p438
      %p440 = scmp.ne.s32.totalorder %s429, %s430
      %p441 = scmp.eq.s32.totalorder %s29, 0
      %p442 = por %p440, %p441
      %p443 = scmp.ne.s32.totalorder %s429, %s430
      %p444 = scmp.eq.s32.totalorder %s30, 3
      %p445 = por %p443, %p444
      %p447 = scmp.ne.s32.totalorder %s430, %s446
      %p448 = scmp.eq.s32.totalorder %s30, 0
      %p449 = por %p447, %p448
      %p450 = scmp.le.s32.totalorder 1, %s24
      %p451 = scmp.lt.s32.totalorder %s24, 5
      %p452 = pnand %p450, %p451
      %p453 = pneg %p452
      // Predicated region
      $region9: #{tpu_custom_call.1} parent=5 // pred_check
        _
      $region10: #{tpu_custom_call.1} parent=5 // pred_check_branch
        %455 = sbr.rel (%p452) target = $region12
      $region11: #{tpu_custom_call.1} parent=5 // pred_region
        %s456 = ssub.s32 %s24, 1
        // Predicated region
        $region13: #{tpu_custom_call.1} parent=11 // pred_check
          %p457 = pneg %p395
        $region14: #{tpu_custom_call.1} parent=11 // pred_check_branch
          %459 = sbr.rel (%p457) target = $region16
        $region15: #{tpu_custom_call.1} parent=11 // pred_region
          _
        $region16: #{tpu_custom_call.1} parent=11 // pred_fallthru
          _
        // Predicated region
        $region17: #{tpu_custom_call.1} parent=11 // pred_check
          %p460 = pneg %p416
        $region18: #{tpu_custom_call.1} parent=11 // pred_check_branch
          %462 = sbr.rel (%p460) target = $region20
        $region19: #{tpu_custom_call.1} parent=11 // pred_region
          _
        $region20: #{tpu_custom_call.1} parent=11 // pred_fallthru
          _
      $region12: #{tpu_custom_call.1} parent=5 // pred_fallthru
        _
      %p463 = scmp.lt.s32.totalorder %s24, 4
      // Predicated region
      $region21: #{tpu_custom_call.1} parent=5 // pred_check
        %p464 = pneg %p463
      $region22: #{tpu_custom_call.1} parent=5 // pred_check_branch
        %466 = sbr.rel (%p464) target = $region24
      $region23: #{tpu_custom_call.1} parent=5 // pred_region
        // Predicated region
        $region25: #{tpu_custom_call.1} parent=23 // pred_check
          %p467 = pneg %p56
        $region26: #{tpu_custom_call.1} parent=23 // pred_check_branch
          %469 = sbr.rel (%p467) target = $region28
        $region27: #{tpu_custom_call.1} parent=23 // pred_region
          %p470 = scmp.lt.s32.totalorder %s31, 1
          %s471 = scalar_select %p470, %s31, 1
          %s472 = smul.addr %s471, 4
          %s473 = scalar_lea.vmem %s0, %s472
        $region28: #{tpu_custom_call.1} parent=23 // pred_fallthru
          _
        // Predicated region
        $region29: #{tpu_custom_call.1} parent=23 // pred_check
          %p474 = pneg %p82
        $region30: #{tpu_custom_call.1} parent=23 // pred_check_branch
          %476 = sbr.rel (%p474) target = $region32
        $region31: #{tpu_custom_call.1} parent=23 // pred_region
          %p477 = scmp.lt.s32.totalorder %s32, 1
          %s478 = scalar_select %p477, %s32, 1
          %s479 = scalar_lea.vmem %s1, %s478
        $region32: #{tpu_custom_call.1} parent=23 // pred_fallthru
          _
        // Predicated region
        $region33: #{tpu_custom_call.1} parent=23 // pred_check
          %p480 = pneg %p108
        $region34: #{tpu_custom_call.1} parent=23 // pred_check_branch
          %482 = sbr.rel (%p480) target = $region36
        $region35: #{tpu_custom_call.1} parent=23 // pred_region
          %p483 = scmp.lt.s32.totalorder %s32, 1
          %s484 = scalar_select %p483, %s32, 1
          %s485 = scalar_lea.vmem %s2, %s484
        $region36: #{tpu_custom_call.1} parent=23 // pred_fallthru
          _
        // Predicated region
        $region37: #{tpu_custom_call.1} parent=23 // pred_check
          %p486 = pneg %p134
        $region38: #{tpu_custom_call.1} parent=23 // pred_check_branch
          %488 = sbr.rel (%p486) target = $region40
        $region39: #{tpu_custom_call.1} parent=23 // pred_region
          %p489 = scmp.lt.s32.totalorder %s32, 1
          %s490 = scalar_select %p489, %s32, 1
          %s491 = smul.addr %s490, 4
          %s492 = smul.addr %s491, 4
          %s493 = scalar_lea.vmem %s3, %s492
        $region40: #{tpu_custom_call.1} parent=23 // pred_fallthru
          _
        // Predicated region
        $region41: #{tpu_custom_call.1} parent=23 // pred_check
          %p494 = pneg %p160
        $region42: #{tpu_custom_call.1} parent=23 // pred_check_branch
          %496 = sbr.rel (%p494) target = $region44
        $region43: #{tpu_custom_call.1} parent=23 // pred_region
          %p497 = scmp.lt.s32.totalorder %s32, 1
          %s498 = scalar_select %p497, %s32, 1
          %s499 = scalar_lea.vmem %s4, %s498
        $region44: #{tpu_custom_call.1} parent=23 // pred_fallthru
          _
        // Predicated region
        $region45: #{tpu_custom_call.1} parent=23 // pred_check
          %p500 = pneg %p186
        $region46: #{tpu_custom_call.1} parent=23 // pred_check_branch
          %502 = sbr.rel (%p500) target = $region48
        $region47: #{tpu_custom_call.1} parent=23 // pred_region
          %p503 = scmp.lt.s32.totalorder %s32, 1
          %s504 = scalar_select %p503, %s32, 1
          %s505 = smul.addr %s504, 4
          %s506 = smul.addr %s505, 4
          %s507 = scalar_lea.vmem %s5, %s506
        $region48: #{tpu_custom_call.1} parent=23 // pred_fallthru
          _
        // Predicated region
        $region49: #{tpu_custom_call.1} parent=23 // pred_check
          %p508 = pneg %p212
        $region50: #{tpu_custom_call.1} parent=23 // pred_check_branch
          %510 = sbr.rel (%p508) target = $region52
        $region51: #{tpu_custom_call.1} parent=23 // pred_region
          %p511 = scmp.lt.s32.totalorder %s32, 1
          %s512 = scalar_select %p511, %s32, 1
          %s513 = scalar_lea.vmem %s6, %s512
        $region52: #{tpu_custom_call.1} parent=23 // pred_fallthru
          _
        // Predicated region
        $region53: #{tpu_custom_call.1} parent=23 // pred_check
          %p514 = pneg %p238
        $region54: #{tpu_custom_call.1} parent=23 // pred_check_branch
          %516 = sbr.rel (%p514) target = $region56
        $region55: #{tpu_custom_call.1} parent=23 // pred_region
          %p517 = scmp.lt.s32.totalorder %s32, 1
          %s518 = scalar_select %p517, %s32, 1
          %s519 = scalar_lea.vmem %s7, %s518
        $region56: #{tpu_custom_call.1} parent=23 // pred_fallthru
          _
        // Predicated region
        $region57: #{tpu_custom_call.1} parent=23 // pred_check
          %p520 = pneg %p264
        $region58: #{tpu_custom_call.1} parent=23 // pred_check_branch
          %522 = sbr.rel (%p520) target = $region60
        $region59: #{tpu_custom_call.1} parent=23 // pred_region
          %p523 = scmp.lt.s32.totalorder %s32, 1
          %s524 = scalar_select %p523, %s32, 1
          %s525 = scalar_lea.vmem %s8, %s524
        $region60: #{tpu_custom_call.1} parent=23 // pred_fallthru
          _
        // Predicated region
        $region61: #{tpu_custom_call.1} parent=23 // pred_check
          %p526 = pneg %p290
        $region62: #{tpu_custom_call.1} parent=23 // pred_check_branch
          %528 = sbr.rel (%p526) target = $region64
        $region63: #{tpu_custom_call.1} parent=23 // pred_region
          %p529 = scmp.lt.s32.totalorder %s32, 1
          %s530 = scalar_select %p529, %s32, 1
          %s531 = smul.addr %s530, 4
          %s532 = smul.addr %s531, 4
          %s533 = scalar_lea.vmem %s9, %s532
        $region64: #{tpu_custom_call.1} parent=23 // pred_fallthru
          _
        // Predicated region
        $region65: #{tpu_custom_call.1} parent=23 // pred_check
          %p534 = pneg %p316
        $region66: #{tpu_custom_call.1} parent=23 // pred_check_branch
          %536 = sbr.rel (%p534) target = $region68
        $region67: #{tpu_custom_call.1} parent=23 // pred_region
          %p537 = scmp.lt.s32.totalorder %s32, 1
          %s538 = scalar_select %p537, %s32, 1
          %s539 = scalar_lea.vmem %s10, %s538
        $region68: #{tpu_custom_call.1} parent=23 // pred_fallthru
          _
        // Predicated region
        $region69: #{tpu_custom_call.1} parent=23 // pred_check
          %p540 = pneg %p342
        $region70: #{tpu_custom_call.1} parent=23 // pred_check_branch
          %542 = sbr.rel (%p540) target = $region72
        $region71: #{tpu_custom_call.1} parent=23 // pred_region
          %p543 = scmp.lt.s32.totalorder %s32, 1
          %s544 = scalar_select %p543, %s32, 1
          %s545 = smul.addr %s544, 16
          %s546 = smul.addr %s545, 4
          %s547 = scalar_lea.vmem %s11, %s546
        $region72: #{tpu_custom_call.1} parent=23 // pred_fallthru
          _
        // Predicated region
        $region73: #{tpu_custom_call.1} parent=23 // pred_check
          %p548 = pneg %p368
        $region74: #{tpu_custom_call.1} parent=23 // pred_check_branch
          %550 = sbr.rel (%p548) target = $region76
        $region75: #{tpu_custom_call.1} parent=23 // pred_region
          %p551 = scmp.lt.s32.totalorder %s32, 1
          %s552 = scalar_select %p551, %s32, 1
          %s553 = scalar_lea.vmem %s12, %s552
        $region76: #{tpu_custom_call.1} parent=23 // pred_fallthru
          _
      $region24: #{tpu_custom_call.1} parent=5 // pred_fallthru
        _
      %p554 = scmp.le.s32.totalorder 1, %s24
      %p555 = scmp.lt.s32.totalorder %s24, 5
      %p556 = pnand %p554, %p555
      %p557 = pneg %p556
      // Predicated region
      $region77: #{tpu_custom_call.1} parent=5 // pred_check
        _
      $region78: #{tpu_custom_call.1} parent=5 // pred_check_branch
        %559 = sbr.rel (%p556) target = $region80
      $region79: #{tpu_custom_call.1} parent=5 // pred_region
        %s560 = ssub.s32 %s24, 1
        %p561 = scmp.lt.s32.totalorder %s33, 1
        %s562 = scalar_select %p561, %s33, 1
        %s563 = smul.addr %s562, 4
        %s564 = scalar_lea.vmem %s0, %s563
        %p565 = pneg %p62
        %p566 = pneg %p59
        %p567 = scmp.lt.s32.totalorder %s34, 1
        %s568 = scalar_select %p567, %s34, 1
        %s569 = scalar_lea.vmem %s1, %s568
        %p570 = pneg %p88
        %p571 = pneg %p85
        %p572 = scmp.lt.s32.totalorder %s34, 1
        %s573 = scalar_select %p572, %s34, 1
        %s574 = scalar_lea.vmem %s2, %s573
        %p575 = pneg %p114
        %p576 = pneg %p111
        %p577 = scmp.lt.s32.totalorder %s34, 1
        %s578 = scalar_select %p577, %s34, 1
        %s579 = smul.addr %s578, 4
        %s580 = smul.addr %s579, 4
        %s581 = scalar_lea.vmem %s3, %s580
        %p582 = pneg %p140
        %p583 = pneg %p137
        %p584 = scmp.lt.s32.totalorder %s34, 1
        %s585 = scalar_select %p584, %s34, 1
        %s586 = scalar_lea.vmem %s4, %s585
        %p587 = pneg %p166
        %p588 = pneg %p163
        %p589 = scmp.lt.s32.totalorder %s34, 1
        %s590 = scalar_select %p589, %s34, 1
        %s591 = smul.addr %s590, 4
        %s592 = smul.addr %s591, 4
        %s593 = scalar_lea.vmem %s5, %s592
        %p594 = pneg %p192
        %p595 = pneg %p189
        %p596 = scmp.lt.s32.totalorder %s34, 1
        %s597 = scalar_select %p596, %s34, 1
        %s598 = scalar_lea.vmem %s6, %s597
        %p599 = pneg %p218
        %p600 = pneg %p215
        %p601 = scmp.lt.s32.totalorder %s34, 1
        %s602 = scalar_select %p601, %s34, 1
        %s603 = scalar_lea.vmem %s7, %s602
        %p604 = pneg %p244
        %p605 = pneg %p241
        %p606 = scmp.lt.s32.totalorder %s34, 1
        %s607 = scalar_select %p606, %s34, 1
        %s608 = scalar_lea.vmem %s8, %s607
        %p609 = pneg %p270
        %p610 = pneg %p267
        %p611 = scmp.lt.s32.totalorder %s34, 1
        %s612 = scalar_select %p611, %s34, 1
        %s613 = smul.addr %s612, 4
        %s614 = smul.addr %s613, 4
        %s615 = scalar_lea.vmem %s9, %s614
        %p616 = pneg %p296
        %p617 = pneg %p293
        %p618 = scmp.lt.s32.totalorder %s34, 1
        %s619 = scalar_select %p618, %s34, 1
        %s620 = scalar_lea.vmem %s10, %s619
        %p621 = pneg %p322
        %p622 = pneg %p319
        %p623 = scmp.lt.s32.totalorder %s34, 1
        %s624 = scalar_select %p623, %s34, 1
        %s625 = smul.addr %s624, 16
        %s626 = smul.addr %s625, 4
        %s627 = scalar_lea.vmem %s11, %s626
        %p628 = pneg %p348
        %p629 = pneg %p345
        %p630 = scmp.lt.s32.totalorder %s34, 1
        %s631 = scalar_select %p630, %s34, 1
        %s632 = scalar_lea.vmem %s12, %s631
        %p633 = pneg %p374
        %p634 = pneg %p371
        %p635 = pneg %p395
        %p636 = pneg %p392
        %p637 = pneg %p416
        %p638 = pneg %p413
        %p639 = pneg %p442
        %p640 = pneg %p439
        %s641 = sand.u32 %s429, 1
        %s642 = scalar_lea.sflag [#allocation5], %s641
        %s643 = sand.u32 %s429, 1
        %s644 = smul.addr %s643, 4
        %s645 = scalar_lea.vmem [#allocation4], %s644
        %p646 = scmp.lt.s32.totalorder %s33, 1
        %s647 = scalar_select %p646, %s33, 1
        %s648 = smul.addr %s647, 4
        %s649 = scalar_lea.vmem %s0, %s648
        %p650 = scmp.lt.s32.totalorder %s34, 1
        %s651 = scalar_select %p650, %s34, 1
        %s652 = scalar_lea.vmem %s1, %s651
        %p653 = scmp.lt.s32.totalorder %s34, 1
        %s654 = scalar_select %p653, %s34, 1
        %s655 = scalar_lea.vmem %s2, %s654
        %p656 = scmp.lt.s32.totalorder %s34, 1
        %s657 = scalar_select %p656, %s34, 1
        %s658 = smul.addr %s657, 4
        %s659 = smul.addr %s658, 4
        %s660 = scalar_lea.vmem %s3, %s659
        %p661 = scmp.lt.s32.totalorder %s34, 1
        %s662 = scalar_select %p661, %s34, 1
        %s663 = scalar_lea.vmem %s4, %s662
        %p664 = scmp.lt.s32.totalorder %s34, 1
        %s665 = scalar_select %p664, %s34, 1
        %s666 = smul.addr %s665, 4
        %s667 = smul.addr %s666, 4
        %s668 = scalar_lea.vmem %s5, %s667
        %p669 = scmp.lt.s32.totalorder %s34, 1
        %s670 = scalar_select %p669, %s34, 1
        %s671 = scalar_lea.vmem %s6, %s670
        %p672 = scmp.lt.s32.totalorder %s34, 1
        %s673 = scalar_select %p672, %s34, 1
        %s674 = scalar_lea.vmem %s7, %s673
        %p675 = scmp.lt.s32.totalorder %s34, 1
        %s676 = scalar_select %p675, %s34, 1
        %s677 = scalar_lea.vmem %s8, %s676
        %p678 = scmp.lt.s32.totalorder %s34, 1
        %s679 = scalar_select %p678, %s34, 1
        %s680 = smul.addr %s679, 4
        %s681 = smul.addr %s680, 4
        %s682 = scalar_lea.vmem %s9, %s681
        %p683 = scmp.lt.s32.totalorder %s34, 1
        %s684 = scalar_select %p683, %s34, 1
        %s685 = scalar_lea.vmem %s10, %s684
        %p686 = scmp.lt.s32.totalorder %s34, 1
        %s687 = scalar_select %p686, %s34, 1
        %s688 = smul.addr %s687, 16
        %s689 = smul.addr %s688, 4
        %s690 = scalar_lea.vmem %s11, %s689
        %p691 = scmp.lt.s32.totalorder %s34, 1
        %s692 = scalar_select %p691, %s34, 1
        %s693 = scalar_lea.vmem %s12, %s692
        %p695 = scmp.eq.s32.totalorder %s34, 0
        // Predicated region
        $region81: #{tpu_custom_call.1} parent=79 // pred_check
          %p696 = pneg %p695
        $region82: #{tpu_custom_call.1} parent=79 // pred_check_branch
          %698 = sbr.rel (%p696) target = $region84
        $region83: #{tpu_custom_call.1} parent=79 // pred_region
          %v699 = vld [vmem:[%s649] sm:$0xf]
          %v700 = vunpack.c.l.bf16 %v699
          %vm701 = vcmask 261120
          %702 = vst.msk [vmem:[#allocation2] sm:$0xff] %vm701, %v700
        $region84: #{tpu_custom_call.1} parent=79 // pred_fallthru
          _
        %v703 = vld [vmem:[#allocation2] sm:$0xff]
        %v704 = vld [vmem:[%s652] sm:$0x1]
        %v705 = vld [vmem:[%s655] sm:$0x1]
        %vm706 = vcmask 261120
        %v707 = vsel %vm706, %v703, 0.0
        %708 = vadd.xlane.f32.xlu0 %v707
        %v709 = vpop.xlane.xlu0 %708
        %v710 = vrcp.pop 32.0
        %v711 = vmul.f32 32.0, %v710
        %v712 = vsub.f32 1.0, %v711
        %v713 = vmul.f32 %v710, %v712
        %v714 = vadd.f32 %v710, %v713
        %vm715 = vweird.f32 %v710
        %v716 = vsel %vm715, %v710, %v714
        %v717 = vmul.f32 %v709, %v716
        %v718 = vsub.f32 %v703, %v717
        %v719 = vmul.f32 %v718, %v718
        %v720 = vsel %vm706, %v719, 0.0
        %721 = vadd.xlane.f32.xlu0 %v720
        %v722 = vpop.xlane.xlu0 %721
        %v723 = vmul.f32 %v722, %v716
        %v724 = vadd.f32 %v723, 1e-05
        %v725 = vrsqrt.pop %v724
        %v726 = vmul.f32 %v725, %v724
        %v727 = vmul.f32 %v726, %v725
        %v728 = vmul.f32 0.5, %v727
        %v729 = vsub.f32 1.5, %v728
        %v730 = vmul.f32 %v725, %v729
        %vm731 = vweird.f32 %v724
        %vm732 = vweird.f32 %v725
        %vm733 = vmor %vm731, %vm732
        %v734 = vsel %vm733, %v725, %v730
        %v735 = vmul.f32 %v718, %v734
        %v737 = vperm.slane %v704, 0
        %v739 = vmul.f32 %v735, %v737
        %v741 = vperm.slane %v705, 0
        %v743 = vadd.f32 %v739, %v741
        %v744 = vpack.c.bf16 %v743, %v743
        %v745 = vld [vmem:[%s660] sm:$0xf]
        %v746 = vld [vmem:[%s660 + $0x4] sm:$0xf]
        %v747 = vld [vmem:[%s660 + $0x8] sm:$0xf]
        %v748 = vld [vmem:[%s660 + $0xc] sm:$0xf]
        %v749 = vld [vmem:[%s663] sm:$0x1]
        %v751 = vperm.slane %v749, 0
        %v757 = vunpack.c.l.b16 %v745
        %v758 = vunpack.c.l.b16 %v746
        %v759 = vunpack.c.l.b16 %v747
        %v760 = vunpack.c.l.b16 %v748
        %v761 = vpack.c.b16 %v758, %v757
        %v762 = vpack.c.b16 %v760, %v759
        %v766 = vsel %vm706, %v744, 0
        %768 = vmatpush.bf16.msra.mxu0 0
        %769 = vmatpush.bf16.msra.mxu0 0
        %770 = vmatpush.bf16.msra.mxu0 0
        %771 = vmatpush.bf16.msra.mxu0 0
        %772 = vmatpush.bf16.msra.mxu0 0
        %773 = vmatpush.bf16.msra.mxu0 0
        %774 = vmatpush.bf16.msra.mxu0 %v762
        %775 = vmatpush.bf16.msra.mxu0 %v761
        %776 = vmatmul.bf16.gmra.mxu0 %v766
        %v777 = vpop.f32.mrf.mxu0
        %v778 = vadd.f32 %v751, %v777
        %v779 = vpop.f32.mrf.mxu0
        %780 = vdwg.mxu0
        %v781 = vlaneseq
        %v782 = vshrl.u32 %v781, 7
        %v783 = vlaneseq
        %v784 = vand.u32 %v783, 127
        %vm785 = vcmp.ge.s32.totalorder %v782, %v784
        %v786 = vmul.f32 %v778, 0.35355338
        %v787 = vpack.c.bf16 %v786, %v786
        %v788 = vpack.c.bf16 %v778, %v778
        %790 = vrot.lane.b32.xlu0 %v788, 96
        %v791 = vpop.permute.xlu0 %790
        %vm792 = vcmask 64512
        %v794 = vsel %vm792, %v787, 0
        %v797 = vsel %vm792, %v791, 0
        %799 = vmatpush.bf16.xpose.msra.mxu0 0
        %800 = vmatpush.bf16.xpose.msra.mxu0 0
        %801 = vmatpush.bf16.xpose.msra.mxu0 0
        %802 = vmatpush.bf16.xpose.msra.mxu0 0
        %803 = vmatpush.bf16.xpose.msra.mxu0 0
        %804 = vmatpush.bf16.xpose.msra.mxu0 0
        %805 = vmatpush.bf16.xpose.msra.mxu0 0
        %806 = vmatpush.bf16.xpose.msra.mxu0 %v797
        %807 = vmatmul.bf16.gmra.mxu0 %v794
        %v808 = vpop.f32.mrf.mxu0
        %v809 = vadd.f32 0.0, %v808
        %v810 = vpop.f32.mrf.mxu0
        %811 = vdwg.mxu0
        %v812 = vsel %vm785, %v809, -1e+30
        %v813 = vsel %vm792, %v812, -inf
        %814 = vmax.xlane.f32.xlu0 %v813
        %v815 = vpop.xlane.xlu0 %814
        %v816 = vsub.f32 %v812, %v815
        %v817 = vmul.f32 %v816, 1.442695
        %v818 = vpow.pop %v817
        %v819 = vsel %vm792, %v818, 0.0
        %820 = vadd.xlane.f32.xlu0 %v819
        %v821 = vpop.xlane.xlu0 %820
        %v822 = vrcp.pop %v821
        %v823 = vmul.f32 %v818, %v822
        %v824 = vpack.c.bf16 %v823, %v823
        %825 = vrot.lane.b32.xlu0 %v788, 64
        %v826 = vpop.permute.xlu0 %825
        %v828 = vsel %vm792, %v824, 0
        %vm830 = vcmask 1043456
        %v832 = vsel %vm830, %v826, 0
        %834 = vmatpush.bf16.msra.mxu0 0
        %835 = vmatpush.bf16.msra.mxu0 0
        %836 = vmatpush.bf16.msra.mxu0 0
        %837 = vmatpush.bf16.msra.mxu0 0
        %838 = vmatpush.bf16.msra.mxu0 0
        %839 = vmatpush.bf16.msra.mxu0 0
        %840 = vmatpush.bf16.msra.mxu0 0
        %841 = vmatpush.bf16.msra.mxu0 %v832
        %842 = vmatmul.bf16.gmra.mxu0 %v828
        %v843 = vpop.f32.mrf.mxu0
        %v844 = vadd.f32 0.0, %v843
        %v845 = vpop.f32.mrf.mxu0
        %846 = vdwg.mxu0
        %v847 = vpack.c.bf16 %v844, %v844
        %vm848 = vcmask 60416
        %849 = vst.msk [vmem:[#allocation3] sm:$0xf] %vm848, %v847
        %851 = vrot.lane.b32.xlu0 %v787, 120
        %v852 = vpop.permute.xlu0 %851
        %853 = vrot.lane.b32.xlu0 %v788, 88
        %v854 = vpop.permute.xlu0 %853
        %v856 = vsel %vm792, %v852, 0
        %v859 = vsel %vm792, %v854, 0
        %861 = vmatpush.bf16.xpose.msra.mxu0 0
        %862 = vmatpush.bf16.xpose.msra.mxu0 0
        %863 = vmatpush.bf16.xpose.msra.mxu0 0
        %864 = vmatpush.bf16.xpose.msra.mxu0 0
        %865 = vmatpush.bf16.xpose.msra.mxu0 0
        %866 = vmatpush.bf16.xpose.msra.mxu0 0
        %867 = vmatpush.bf16.xpose.msra.mxu0 0
        %868 = vmatpush.bf16.xpose.msra.mxu0 %v859
        %869 = vmatmul.bf16.gmra.mxu0 %v856
        %v870 = vpop.f32.mrf.mxu0
        %v871 = vadd.f32 0.0, %v870
        %v872 = vpop.f32.mrf.mxu0
        %873 = vdwg.mxu0
        %v874 = vsel %vm785, %v871, -1e+30
        %v875 = vsel %vm792, %v874, -inf
        %876 = vmax.xlane.f32.xlu0 %v875
        %v877 = vpop.xlane.xlu0 %876
        %v878 = vsub.f32 %v874, %v877
        %v879 = vmul.f32 %v878, 1.442695
        %v880 = vpow.pop %v879
        %v881 = vsel %vm792, %v880, 0.0
        %882 = vadd.xlane.f32.xlu0 %v881
        %v883 = vpop.xlane.xlu0 %882
        %v884 = vrcp.pop %v883
        %v885 = vmul.f32 %v880, %v884
        %v886 = vpack.c.bf16 %v885, %v885
        %887 = vrot.lane.b32.xlu0 %v788, 56
        %v888 = vpop.permute.xlu0 %887
        %v890 = vsel %vm792, %v886, 0
        %v893 = vsel %vm830, %v888, 0
        %895 = vmatpush.bf16.msra.mxu0 0
        %896 = vmatpush.bf16.msra.mxu0 0
        %897 = vmatpush.bf16.msra.mxu0 0
        %898 = vmatpush.bf16.msra.mxu0 0
        %899 = vmatpush.bf16.msra.mxu0 0
        %900 = vmatpush.bf16.msra.mxu0 0
        %901 = vmatpush.bf16.msra.mxu0 0
        %902 = vmatpush.bf16.msra.mxu0 %v893
        %903 = vmatmul.bf16.gmra.mxu0 %v890
        %v904 = vpop.f32.mrf.mxu0
        %v905 = vadd.f32 0.0, %v904
        %v906 = vpop.f32.mrf.mxu0
        %907 = vdwg.mxu0
        %v908 = vpack.c.bf16 %v905, %v905
        %910 = vrot.lane.b32.xlu0 %v908, 8
        %v911 = vpop.permute.xlu0 %910
        %vm913 = vcmask 126016
        %914 = vst.msk [vmem:[#allocation3] sm:$0xf] %vm913, %v911
        %915 = vrot.lane.b32.xlu0 %v787, 112
        %v916 = vpop.permute.xlu0 %915
        %917 = vrot.lane.b32.xlu0 %v788, 80
        %v918 = vpop.permute.xlu0 %917
        %v920 = vsel %vm792, %v916, 0
        %v923 = vsel %vm792, %v918, 0
        %925 = vmatpush.bf16.xpose.msra.mxu0 0
        %926 = vmatpush.bf16.xpose.msra.mxu0 0
        %927 = vmatpush.bf16.xpose.msra.mxu0 0
        %928 = vmatpush.bf16.xpose.msra.mxu0 0
        %929 = vmatpush.bf16.xpose.msra.mxu0 0
        %930 = vmatpush.bf16.xpose.msra.mxu0 0
        %931 = vmatpush.bf16.xpose.msra.mxu0 0
        %932 = vmatpush.bf16.xpose.msra.mxu0 %v923
        %933 = vmatmul.bf16.gmra.mxu0 %v920
        %v934 = vpop.f32.mrf.mxu0
        %v935 = vadd.f32 0.0, %v934
        %v936 = vpop.f32.mrf.mxu0
        %937 = vdwg.mxu0
        %v938 = vsel %vm785, %v935, -1e+30
        %v939 = vsel %vm792, %v938, -inf
        %940 = vmax.xlane.f32.xlu0 %v939
        %v941 = vpop.xlane.xlu0 %940
        %v942 = vsub.f32 %v938, %v941
        %v943 = vmul.f32 %v942, 1.442695
        %v944 = vpow.pop %v943
        %v945 = vsel %vm792, %v944, 0.0
        %946 = vadd.xlane.f32.xlu0 %v945
        %v947 = vpop.xlane.xlu0 %946
        %v948 = vrcp.pop %v947
        %v949 = vmul.f32 %v944, %v948
        %v950 = vpack.c.bf16 %v949, %v949
        %951 = vrot.lane.b32.xlu0 %v788, 48
        %v952 = vpop.permute.xlu0 %951
        %v954 = vsel %vm792, %v950, 0
        %v957 = vsel %vm830, %v952, 0
        %959 = vmatpush.bf16.msra.mxu0 0
        %960 = vmatpush.bf16.msra.mxu0 0
        %961 = vmatpush.bf16.msra.mxu0 0
        %962 = vmatpush.bf16.msra.mxu0 0
        %963 = vmatpush.bf16.msra.mxu0 0
        %964 = vmatpush.bf16.msra.mxu0 0
        %965 = vmatpush.bf16.msra.mxu0 0
        %966 = vmatpush.bf16.msra.mxu0 %v957
        %967 = vmatmul.bf16.gmra.mxu0 %v954
        %v968 = vpop.f32.mrf.mxu0
        %v969 = vadd.f32 0.0, %v968
        %v970 = vpop.f32.mrf.mxu0
        %971 = vdwg.mxu0
        %v972 = vpack.c.bf16 %v969, %v969
        %974 = vrot.lane.b32.xlu0 %v972, 16
        %v975 = vpop.permute.xlu0 %974
        %vm977 = vcmask 191616
        %978 = vst.msk [vmem:[#allocation3] sm:$0xf] %vm977, %v975
        %979 = vrot.lane.b32.xlu0 %v787, 104
        %v980 = vpop.permute.xlu0 %979
        %981 = vrot.lane.b32.xlu0 %v788, 72
        %v982 = vpop.permute.xlu0 %981
        %v984 = vsel %vm792, %v980, 0
        %v987 = vsel %vm792, %v982, 0
        %989 = vmatpush.bf16.xpose.msra.mxu0 0
        %990 = vmatpush.bf16.xpose.msra.mxu0 0
        %991 = vmatpush.bf16.xpose.msra.mxu0 0
        %992 = vmatpush.bf16.xpose.msra.mxu0 0
        %993 = vmatpush.bf16.xpose.msra.mxu0 0
        %994 = vmatpush.bf16.xpose.msra.mxu0 0
        %995 = vmatpush.bf16.xpose.msra.mxu0 0
        %996 = vmatpush.bf16.xpose.msra.mxu0 %v987
        %997 = vmatmul.bf16.gmra.mxu0 %v984
        %v998 = vpop.f32.mrf.mxu0
        %v999 = vadd.f32 0.0, %v998
        %v1000 = vpop.f32.mrf.mxu0
        %1001 = vdwg.mxu0
        %v1002 = vsel %vm785, %v999, -1e+30
        %v1003 = vsel %vm792, %v1002, -inf
        %1004 = vmax.xlane.f32.xlu0 %v1003
        %v1005 = vpop.xlane.xlu0 %1004
        %v1006 = vsub.f32 %v1002, %v1005
        %v1007 = vmul.f32 %v1006, 1.442695
        %v1008 = vpow.pop %v1007
        %v1009 = vsel %vm792, %v1008, 0.0
        %1010 = vadd.xlane.f32.xlu0 %v1009
        %v1011 = vpop.xlane.xlu0 %1010
        %v1012 = vrcp.pop %v1011
        %v1013 = vmul.f32 %v1008, %v1012
        %v1014 = vpack.c.bf16 %v1013, %v1013
        %1015 = vrot.lane.b32.xlu0 %v788, 40
        %v1016 = vpop.permute.xlu0 %1015
        %v1018 = vsel %vm792, %v1014, 0
        %v1021 = vsel %vm830, %v1016, 0
        %1023 = vmatpush.bf16.msra.mxu0 0
        %1024 = vmatpush.bf16.msra.mxu0 0
        %1025 = vmatpush.bf16.msra.mxu0 0
        %1026 = vmatpush.bf16.msra.mxu0 0
        %1027 = vmatpush.bf16.msra.mxu0 0
        %1028 = vmatpush.bf16.msra.mxu0 0
        %1029 = vmatpush.bf16.msra.mxu0 0
        %1030 = vmatpush.bf16.msra.mxu0 %v1021
        %1031 = vmatmul.bf16.gmra.mxu0 %v1018
        %v1032 = vpop.f32.mrf.mxu0
        %v1033 = vadd.f32 0.0, %v1032
        %v1034 = vpop.f32.mrf.mxu0
        %1035 = vdwg.mxu0
        %v1036 = vpack.c.bf16 %v1033, %v1033
        %1038 = vrot.lane.b32.xlu0 %v1036, 24
        %v1039 = vpop.permute.xlu0 %1038
        %vm1041 = vcmask 257216
        %1042 = vst.msk [vmem:[#allocation3] sm:$0xf] %vm1041, %v1039
        %v1043 = vld [vmem:[#allocation3] sm:$0xf]
        %v1044 = vld [vmem:[%s668] sm:$0xf]
        %v1045 = vld [vmem:[%s668 + $0x4] sm:$0xf]
        %v1046 = vld [vmem:[%s668 + $0x8] sm:$0xf]
        %v1047 = vld [vmem:[%s668 + $0xc] sm:$0xf]
        %v1052 = vunpack.c.l.b16 %v1044
        %v1053 = vunpack.c.l.b16 %v1045
        %v1054 = vunpack.c.l.b16 %v1046
        %v1055 = vunpack.c.l.b16 %v1047
        %v1056 = vpack.c.b16 %v1053, %v1052
        %v1057 = vpack.c.b16 %v1055, %v1054
        %v1061 = vsel %vm706, %v1043, 0
        %1063 = vmatpush.bf16.msra.mxu0 0
        %1064 = vmatpush.bf16.msra.mxu0 0
        %1065 = vmatpush.bf16.msra.mxu0 0
        %1066 = vmatpush.bf16.msra.mxu0 0
        %1067 = vmatpush.bf16.msra.mxu0 0
        %1068 = vmatpush.bf16.msra.mxu0 0
        %1069 = vmatpush.bf16.msra.mxu0 %v1057
        %1070 = vmatpush.bf16.msra.mxu0 %v1056
        %1071 = vmatmul.bf16.gmra.mxu0 %v1061
        %v1072 = vpop.f32.mrf.mxu0
        %v1073 = vadd.f32 0.0, %v1072
        %v1074 = vpop.f32.mrf.mxu0
        %1075 = vdwg.mxu0
        %v1076 = vadd.f32 %v703, %v1073
        %v1077 = vld [vmem:[%s671] sm:$0x1]
        %v1079 = vperm.slane %v1077, 0
        %v1081 = vadd.f32 %v1076, %v1079
        %v1082 = vld [vmem:[%s674] sm:$0x1]
        %v1083 = vld [vmem:[%s677] sm:$0x1]
        %v1084 = vsel %vm706, %v1081, 0.0
        %1085 = vadd.xlane.f32.xlu0 %v1084
        %v1086 = vpop.xlane.xlu0 %1085
        %v1087 = vmul.f32 %v1086, %v716
        %v1088 = vsub.f32 %v1081, %v1087
        %v1089 = vmul.f32 %v1088, %v1088
        %v1090 = vsel %vm706, %v1089, 0.0
        %1091 = vadd.xlane.f32.xlu0 %v1090
        %v1092 = vpop.xlane.xlu0 %1091
        %v1093 = vmul.f32 %v1092, %v716
        %v1094 = vadd.f32 %v1093, 1e-05
        %v1095 = vrsqrt.pop %v1094
        %v1096 = vmul.f32 %v1095, %v1094
        %v1097 = vmul.f32 %v1096, %v1095
        %v1098 = vmul.f32 0.5, %v1097
        %v1099 = vsub.f32 1.5, %v1098
        %v1100 = vmul.f32 %v1095, %v1099
        %vm1101 = vweird.f32 %v1094
        %vm1102 = vweird.f32 %v1095
        %vm1103 = vmor %vm1101, %vm1102
        %v1104 = vsel %vm1103, %v1095, %v1100
        %v1105 = vmul.f32 %v1088, %v1104
        %v1107 = vperm.slane %v1082, 0
        %v1109 = vmul.f32 %v1105, %v1107
        %v1111 = vperm.slane %v1083, 0
        %v1113 = vadd.f32 %v1109, %v1111
        %v1114 = vpack.c.bf16 %v1113, %v1113
        %v1115 = vld [vmem:[%s682] sm:$0xf]
        %v1116 = vld [vmem:[%s682 + $0x4] sm:$0xf]
        %v1117 = vld [vmem:[%s682 + $0x8] sm:$0xf]
        %v1118 = vld [vmem:[%s682 + $0xc] sm:$0xf]
        %v1119 = vld [vmem:[%s685] sm:$0x1]
        %v1121 = vperm.slane %v1119, 0
        %v1127 = vunpack.c.l.b16 %v1115
        %v1128 = vunpack.c.l.b16 %v1116
        %v1129 = vunpack.c.l.b16 %v1117
        %v1130 = vunpack.c.l.b16 %v1118
        %v1131 = vpack.c.b16 %v1128, %v1127
        %v1132 = vpack.c.b16 %v1130, %v1129
        %v1136 = vsel %vm706, %v1114, 0
        %1138 = vmatpush.bf16.msra.mxu0 0
        %1139 = vmatpush.bf16.msra.mxu0 0
        %1140 = vmatpush.bf16.msra.mxu0 0
        %1141 = vmatpush.bf16.msra.mxu0 0
        %1142 = vmatpush.bf16.msra.mxu0 0
        %1143 = vmatpush.bf16.msra.mxu0 0
        %1144 = vmatpush.bf16.msra.mxu0 %v1132
        %1145 = vmatpush.bf16.msra.mxu0 %v1131
        %1146 = vmatmul.bf16.gmra.mxu0 %v1136
        %v1147 = vpop.f32.mrf.mxu0
        %v1148 = vadd.f32 %v1121, %v1147
        %v1149 = vpop.f32.mrf.mxu0
        %1150 = vdwg.mxu0
        %v1151 = vmul.f32 %v1148, 0.5
        %v1152 = vmul.f32 %v1148, 0.044715
        %v1153 = vmul.f32 %v1152, %v1148
        %v1154 = vmul.f32 %v1153, %v1148
        %v1155 = vadd.f32 %v1148, %v1154
        %v1156 = vmul.f32 %v1155, 0.7978846
        %v1157 = vtanh.pop %v1156
        %v1158 = vadd.f32 %v1157, 1.0
        %v1159 = vmul.f32 %v1151, %v1158
        %v1160 = vpack.c.bf16 %v1159, %v1159
        %v1161 = vld [vmem:[%s690] sm:$0xf]
        %v1162 = vld [vmem:[%s690 + $0x4] sm:$0xf]
        %v1163 = vld [vmem:[%s690 + $0x8] sm:$0xf]
        %v1164 = vld [vmem:[%s690 + $0xc] sm:$0xf]
        %v1165 = vld [vmem:[%s690 + $0x10] sm:$0xf]
        %v1166 = vld [vmem:[%s690 + $0x14] sm:$0xf]
        %v1167 = vld [vmem:[%s690 + $0x18] sm:$0xf]
        %v1168 = vld [vmem:[%s690 + $0x1c] sm:$0xf]
        %v1169 = vld [vmem:[%s690 + $0x20] sm:$0xf]
        %v1170 = vld [vmem:[%s690 + $0x24] sm:$0xf]
        %v1171 = vld [vmem:[%s690 + $0x28] sm:$0xf]
        %v1172 = vld [vmem:[%s690 + $0x2c] sm:$0xf]
        %v1173 = vld [vmem:[%s690 + $0x30] sm:$0xf]
        %v1174 = vld [vmem:[%s690 + $0x34] sm:$0xf]
        %v1175 = vld [vmem:[%s690 + $0x38] sm:$0xf]
        %v1176 = vld [vmem:[%s690 + $0x3c] sm:$0xf]
        %v1193 = vunpack.c.l.b16 %v1161
        %v1194 = vunpack.c.l.b16 %v1162
        %v1195 = vunpack.c.l.b16 %v1163
        %v1196 = vunpack.c.l.b16 %v1164
        %v1197 = vunpack.c.l.b16 %v1165
        %v1198 = vunpack.c.l.b16 %v1166
        %v1199 = vunpack.c.l.b16 %v1167
        %v1200 = vunpack.c.l.b16 %v1168
        %v1201 = vunpack.c.l.b16 %v1169
        %v1202 = vunpack.c.l.b16 %v1170
        %v1203 = vunpack.c.l.b16 %v1171
        %v1204 = vunpack.c.l.b16 %v1172
        %v1205 = vunpack.c.l.b16 %v1173
        %v1206 = vunpack.c.l.b16 %v1174
        %v1207 = vunpack.c.l.b16 %v1175
        %v1208 = vunpack.c.l.b16 %v1176
        %v1209 = vpack.c.b16 %v1194, %v1193
        %v1210 = vpack.c.b16 %v1196, %v1195
        %v1211 = vpack.c.b16 %v1198, %v1197
        %v1212 = vpack.c.b16 %v1200, %v1199
        %v1213 = vpack.c.b16 %v1202, %v1201
        %v1214 = vpack.c.b16 %v1204, %v1203
        %v1215 = vpack.c.b16 %v1206, %v1205
        %v1216 = vpack.c.b16 %v1208, %v1207
        %1225 = vmatpush.bf16.msra.mxu0 %v1216
        %1226 = vmatpush.bf16.msra.mxu0 %v1215
        %1227 = vmatpush.bf16.msra.mxu0 %v1214
        %1228 = vmatpush.bf16.msra.mxu0 %v1213
        %1229 = vmatpush.bf16.msra.mxu0 %v1212
        %1230 = vmatpush.bf16.msra.mxu0 %v1211
        %1231 = vmatpush.bf16.msra.mxu0 %v1210
        %1232 = vmatpush.bf16.msra.mxu0 %v1209
        %1233 = vmatmul.bf16.gmra.mxu0 %v1160
        %v1234 = vpop.f32.mrf.mxu0
        %v1235 = vadd.f32 0.0, %v1234
        %v1236 = vpop.f32.mrf.mxu0
        %1237 = vdwg.mxu0
        %v1238 = vadd.f32 %v1081, %v1235
        %v1239 = vld [vmem:[%s693] sm:$0x1]
        %v1241 = vperm.slane %v1239, 0
        %v1243 = vadd.f32 %v1238, %v1241
        %1244 = vst.msk [vmem:[#allocation2] sm:$0xff] %vm706, %v1243
        %p1245 = scmp.eq.s32.totalorder %s34, 1
        // Predicated region
        $region85: #{tpu_custom_call.1} parent=79 // pred_check
          %p1246 = pneg %p1245
        $region86: #{tpu_custom_call.1} parent=79 // pred_check_branch
          %1248 = sbr.rel (%p1246) target = $region88
        $region87: #{tpu_custom_call.1} parent=79 // pred_region
          %v1249 = vld [vmem:[%s13] sm:$0x1]
          %v1250 = vld [vmem:[%s14] sm:$0x1]
          %v1251 = vsel %vm706, %v1243, 0.0
          %1252 = vadd.xlane.f32.xlu0 %v1251
          %v1253 = vpop.xlane.xlu0 %1252
          %v1254 = vmul.f32 %v1253, %v716
          %v1255 = vsub.f32 %v1243, %v1254
          %v1256 = vmul.f32 %v1255, %v1255
          %v1257 = vsel %vm706, %v1256, 0.0
          %1258 = vadd.xlane.f32.xlu0 %v1257
          %v1259 = vpop.xlane.xlu0 %1258
          %v1260 = vmul.f32 %v1259, %v716
          %v1261 = vadd.f32 %v1260, 1e-05
          %v1262 = vrsqrt.pop %v1261
          %v1263 = vmul.f32 %v1262, %v1261
          %v1264 = vmul.f32 %v1263, %v1262
          %v1265 = vmul.f32 0.5, %v1264
          %v1266 = vsub.f32 1.5, %v1265
          %v1267 = vmul.f32 %v1262, %v1266
          %vm1268 = vweird.f32 %v1261
          %vm1269 = vweird.f32 %v1262
          %vm1270 = vmor %vm1268, %vm1269
          %v1271 = vsel %vm1270, %v1262, %v1267
          %v1272 = vmul.f32 %v1255, %v1271
          %v1274 = vperm.slane %v1249, 0
          %v1276 = vmul.f32 %v1272, %v1274
          %v1278 = vperm.slane %v1250, 0
          %v1280 = vadd.f32 %v1276, %v1278
          %v1281 = vpack.c.bf16 %v1280, %v1280
          %vm1282 = vcmask 257024
          %1283 = vst.msk [vmem:[%s645] sm:$0xf] %vm1282, %v1281
        $region88: #{tpu_custom_call.1} parent=79 // pred_fallthru
          _
        %s1284 = sand.u32 %s429, 1
        %s1285 = scalar_lea.sflag [#allocation5], %s1284
        %s1286 = sand.u32 %s429, 1
        %s1287 = smul.addr %s1286, 4
        %s1288 = scalar_lea.vmem [#allocation4], %s1287
        // Predicated region
        $region89: #{tpu_custom_call.1} parent=79 // pred_check
          %p1289 = pneg %p439
        $region90: #{tpu_custom_call.1} parent=79 // pred_check_branch
          %1291 = sbr.rel (%p1289) target = $region92
        $region91: #{tpu_custom_call.1} parent=79 // pred_region
          %1293 = vsyncadd %s1285, 0
          %s1294 = smul.addr %s33, 4
          %s1295 = scalar_lea.hbm %s15, %s1294
          %s1297 = sshll.u32 %s1288, 4
          %s1298 = int_to_ptr.vmem [resolvable:$true] %s1297
          %s1299 = sshll.u32 %s1295, 4
          %s1300 = int_to_ptr.hbm [resolvable:$true] %s1299
          %1302 = dma.vmem_to_hbm [thread:$0]  %s1298, 64, %s1300, %s1285
        $region92: #{tpu_custom_call.1} parent=79 // pred_fallthru
          _
      $region80: #{tpu_custom_call.1} parent=5 // pred_fallthru
        _
      %p1303 = scmp.le.s32.totalorder 2, %s24
      // Predicated region
      $region93: #{tpu_custom_call.1} parent=5 // pred_check
        %p1304 = pneg %p1303
      $region94: #{tpu_custom_call.1} parent=5 // pred_check_branch
        %1306 = sbr.rel (%p1304) target = $region96
      $region95: #{tpu_custom_call.1} parent=5 // pred_region
        %s1307 = ssub.s32 %s24, 2
        // Predicated region
        $region97: #{tpu_custom_call.1} parent=95 // pred_check
          %p1308 = pneg %p445
        $region98: #{tpu_custom_call.1} parent=95 // pred_check_branch
          %1310 = sbr.rel (%p1308) target = $region100
        $region99: #{tpu_custom_call.1} parent=95 // pred_region
          %s1311 = sand.u32 %s430, 1
          %s1312 = scalar_lea.sflag [#allocation5], %s1311
          %s1313 = sand.u32 %s430, 1
          %s1314 = smul.addr %s1313, 4
          %s1315 = scalar_lea.vmem [#allocation4], %s1314
          %1317 = dma.done %s1312, 64
        $region100: #{tpu_custom_call.1} parent=95 // pred_fallthru
          _
      $region96: #{tpu_custom_call.1} parent=5 // pred_fallthru
        _
    $region6: #{tpu_custom_call.1} parent=1 // loop_footer
      %s28 = sadd.s32 1, %s24
    $region7: #{tpu_custom_call.1} parent=1 // loop_footer_branch
      %23 = sbr.rel target = $region3
    $region8: #{tpu_custom_call.1} parent=1 // loop_exit
      _
    %1318 = vsyncpa [#allocation5], 1
    %s1319 = scalar_lea.sflag [#allocation5], 1
    %1320 = vsyncpa %s1319, 1

</llo_original>
